<compile_context>
chip_gen: v7x
topology: tpu7x:2x2x1
jax: 0.10.0
libtpu: 0.0.40
codegen_flags: <defaults>
</compile_context>

<pallas_src>
import functools

import numpy as np
import jax
import jax.numpy as jnp
from jax.experimental import pallas as pl
from jax.experimental.pallas import tpu as pltpu

EPS = 1e-5


# ------------------------------ Pallas kernel ------------------------------- #

def _fused_conv_bn_relu_kernel(x_ref, bw_ref, gam_ref, bet_ref, sel_ref,
                               selt_ref, y_ref,
                               sum_scr, ssq_scr, scale_scr, shift_scr,
                               *, h, oh, m_count):
    """Two-phase fused conv + training-BN + ReLU.

    Grid = (phase, batch_block); phase 0 accumulates BN statistics, phase 1
    recomputes the (cheap) conv and applies BN+ReLU.

    x_ref    : (B_tile*H, W*Cin)       flat NHWC rows of B_tile samples
    bw_ref   : (KH, W*Cin, OWC)        block-banded weights (resident)
    gam_ref  : (1, Cout)               BN gamma
    bet_ref  : (1, Cout)               BN beta
    sel_ref  : (OWC, Cout)             lane-column -> channel selection matrix
    selt_ref : (Cout, OWC)             channel -> lane-column tiling matrix
    y_ref    : (B_tile*H, OWC)         output rows (lane-dense, 128 lanes)
    *_scr    : (1, OWC) f32 VMEM       resident statistics / scale / shift
    """
    p = pl.program_id(0)          # 0 = statistics pass, 1 = apply pass
    b = pl.program_id(1)          # batch block

    kh = bw_ref.shape[0]
    rows = x_ref.shape[0]         # B_tile * H
    owc = y_ref.shape[1]
    mp = rows - kh + 1            # conv rows computed per block

    # --- conv: KH accumulated MXU matmuls with M = B_tile*H - KH + 1 rows ---
    # Rows q = s*H + r with r < OH are valid conv outputs; rows that straddle
    # a sample boundary (r >= OH) are garbage and are masked / sliced off.
    acc = jnp.dot(x_ref[0:mp, :], bw_ref[0], preferred_element_type=jnp.float32)
    for i in range(1, kh):
        acc = acc + jnp.dot(x_ref[i:i + mp, :], bw_ref[i],
                            preferred_element_type=jnp.float32)

    # --- phase 0: accumulate per-lane-column BN statistics over valid rows ---
    @pl.when(jnp.logical_and(p == 0, b == 0))
    def _init():
        sum_scr[...] = jnp.zeros_like(sum_scr)
        ssq_scr[...] = jnp.zeros_like(ssq_scr)

    @pl.when(p == 0)
    def _stats():
        r = jax.lax.broadcasted_iota(jnp.int32, (mp, 1), 0)
        valid = ((r % h) < oh).astype(jnp.float32)      # mask boundary rows
        av = acc * valid
        sum_scr[...] = sum_scr[...] + jnp.sum(av, axis=0, keepdims=True)
        ssq_scr[...] = ssq_scr[...] + jnp.sum(av * acc, axis=0, keepdims=True)

    # --- phase boundary: per-channel scale/shift from accumulated stats ---
    @pl.when(jnp.logical_and(p == 1, b == 0))
    def _finalize():
        inv_m = jnp.float32(1.0 / m_count)
        ch_sum = jnp.dot(sum_scr[...], sel_ref[...],
                         preferred_element_type=jnp.float32)   # (1, Cout)
        ch_ssq = jnp.dot(ssq_scr[...], sel_ref[...],
                         preferred_element_type=jnp.float32)
        mean = ch_sum * inv_m
        var = ch_ssq * inv_m - mean * mean                     # biased (training BN)
        sc = gam_ref[...] * jax.lax.rsqrt(var + EPS)
        sh = bet_ref[...] - mean * sc
        # Tile per-channel scale/shift back to the lane-dense (ow, co) layout.
        scale_scr[...] = jnp.dot(sc, selt_ref[...],
                                 preferred_element_type=jnp.float32)
        shift_scr[...] = jnp.dot(sh, selt_ref[...],
                                 preferred_element_type=jnp.float32)

    # --- phase 1: BN apply + ReLU, full-128-lane stores ---
    @pl.when(p == 1)
    def _apply():
        y = jnp.maximum(acc * scale_scr[...] + shift_scr[...], 0.0)
        y_ref[0:mp, :] = y
        # Last KH-1 rows of the block have no conv output; zero for determinism
        # (they are sliced off outside the kernel anyway).
        y_ref[mp:rows, :] = jnp.zeros((rows - mp, owc), jnp.float32)


# --------------------------------- helpers ---------------------------------- #

def _banded_weights(w_hwio, w, ow, owc):
    """HWIO weights -> (KH, W*Cin, OWC) block-banded matrices:
    bw[i, (ow+j)*Cin + ci, ow*Cout + co] = w[i, j, ci, co].
    Columns beyond ow*Cout (lane padding to 128) stay exactly zero."""
    kh, kw, cin, cout = w_hwio.shape
    wflat = w_hwio.astype(jnp.float32).reshape(kh, kw * cin, cout)
    bw = jnp.zeros((kh, w * cin, owc), jnp.float32)
    for o in range(ow):
        bw = bw.at[:, o * cin:o * cin + kw * cin,
                   o * cout:(o + 1) * cout].set(wflat)
    return bw


def _selection_matrices(ow, cout, owc):
    """sel  (OWC, Cout): sums the ow copies of each channel column.
    selT (Cout, OWC): tiles a per-channel vector across the ow copies.
    Padded lane columns stay zero in both (pad outputs end up exactly 0)."""
    sel = np.zeros((owc, cout), np.float32)
    for o in range(ow):
        for c in range(cout):
            sel[o * cout + c, c] = 1.0
    return jnp.asarray(sel), jnp.asarray(sel.T)


def _pick_batch_tile(n, h, wcin, owc, target_rows=256, vmem_budget=8 << 20):
    """Largest divisor of n whose block (B_tile*H rows) stays near the target
    MXU M dimension and well inside VMEM (sized for v7x's 64 MiB)."""
    bt = 1
    for cand in range(1, n + 1):
        if n % cand:
            continue
        rows = cand * h
        blk_bytes = 2 * 4 * rows * (wcin + owc)   # double-buffered in + out
        if rows <= max(target_rows, h) and blk_bytes <= vmem_budget:
            bt = cand
    return bt


# --------------------------------- wrapper ---------------------------------- #

def conv_bn_relu_forward(x_nchw, w_hwio, bias, gamma, beta,
                         *, mxu_dtype=jnp.float32):
    """Conv2d(k=3, s=1, p=0, groups=1) -> BatchNorm2d (training batch stats)
    -> ReLU, PyTorch NCHW in/out.  mxu_dtype=jnp.bfloat16 halves HBM/DMA bytes
    on v6e/v7x (verify vs ~1e-3 tolerance); statistics/apply math stays f32.

    The conv bias is mathematically cancelled by training-mode BN mean
    subtraction, so it is not added on the kernel path."""
    del bias  # cancelled by the batch-mean subtraction
    n, cin, h, w = x_nchw.shape
    kh, kw, cin_w, cout = w_hwio.shape
    assert cin == cin_w, (cin, cin_w)
    oh, ow = h - kh + 1, w - kw + 1
    wcin = w * cin
    owc_real = ow * cout
    owc = ((owc_real + 127) // 128) * 128     # pad lane axis to full vregs

    # NCHW -> NHWC (one cheap pass over the small input), then free contiguous
    # reshape to (N*H, W*Cin) rows; channels minor within the lane axis.
    x2 = (jnp.transpose(x_nchw, (0, 2, 3, 1)).astype(jnp.float32)
          .reshape(n * h, wcin).astype(mxu_dtype))
    bw = _banded_weights(w_hwio, w, ow, owc).astype(mxu_dtype)
    sel, selt = _selection_matrices(ow, cout, owc)
    gam = gamma.astype(jnp.float32).reshape(1, cout)
    bet = beta.astype(jnp.float32).reshape(1, cout)

    bt = _pick_batch_tile(n, h, wcin, owc)
    nb = n // bt
    rows = bt * h
    m_count = n * oh * ow                      # real element count (no padding)

    kernel = functools.partial(_fused_conv_bn_relu_kernel,
                               h=h, oh=oh, m_count=m_count)

    y_full = pl.pallas_call(
        kernel,
        out_shape=jax.ShapeDtypeStruct((n * h, owc), jnp.float32),
        grid_spec=pltpu.PrefetchScalarGridSpec(
            num_scalar_prefetch=0,
            grid=(2, nb),                      # (phase, batch block)
            in_specs=[
                pl.BlockSpec((rows, wcin), lambda p, b: (b, 0)),
                pl.BlockSpec((kh, wcin, owc), lambda p, b: (0, 0, 0)),
                pl.BlockSpec((1, cout), lambda p, b: (0, 0)),
                pl.BlockSpec((1, cout), lambda p, b: (0, 0)),
                pl.BlockSpec((owc, cout), lambda p, b: (0, 0)),
                pl.BlockSpec((cout, owc), lambda p, b: (0, 0)),
            ],
            # Phase 0 never writes output; keep its block index parked at 0 so
            # no uninitialized buffer is ever flushed and block 0 is revisited
            # only consecutively (phase 0 tail -> phase 1 head).
            out_specs=pl.BlockSpec((rows, owc), lambda p, b: (b * p, 0)),
            scratch_shapes=[
                pltpu.VMEM((1, owc), jnp.float32),   # column sums
                pltpu.VMEM((1, owc), jnp.float32),   # column sums of squares
                pltpu.VMEM((1, owc), jnp.float32),   # tiled BN scale
                pltpu.VMEM((1, owc), jnp.float32),   # tiled BN shift
            ],
        ),
        compiler_params=pltpu.CompilerParams(
            # Stats accumulate across batch blocks and phase 1 depends on
            # phase 0's scratch -> both grid axes are sequential.
            dimension_semantics=("arbitrary", "arbitrary"),
            vmem_limit_bytes=32 * 1024 * 1024,
        ),
    )(x2, bw, gam, bet, sel, selt)

    # Drop padded rows/lanes (free reshape + one small slice/transpose pass)
    # and return in PyTorch NCHW layout.
    y = y_full.reshape(n, h, owc)[:, :oh, :owc_real].reshape(n, oh, ow, cout)
    return jnp.transpose(y, (0, 3, 1, 2))


def reference_forward(x_nchw, w_hwio, bias, gamma, beta):
    # Pure-JAX reference, faithful to the PyTorch module (bias included;
    # training-mode BatchNorm semantics).
    x = jnp.transpose(x_nchw, (0, 2, 3, 1)).astype(jnp.float32)
    y = jax.lax.conv_general_dilated(
        x, w_hwio.astype(jnp.float32), window_strides=(1, 1), padding="VALID",
        dimension_numbers=("NHWC", "HWIO", "NHWC")) + bias
    mean = jnp.mean(y, axis=(0, 1, 2))
    var = jnp.var(y, axis=(0, 1, 2))
    y = (y - mean) * jax.lax.rsqrt(var + EPS) * gamma + beta
    y = jnp.maximum(y, 0.0)
    return jnp.transpose(y, (0, 3, 1, 2))


if __name__ == "__main__":
    # conv_bn_relu(in_channels=4, out_channels=8, kernel_size=3, stride=1,
    #              padding=0, has_bn=True, has_relu=True, bias=True, groups=1)
    key = jax.random.PRNGKey(0)
    k_x, k_w, k_b, k_g, k_bt = jax.random.split(key, 5)

    N, Cin, H, W = 2, 4, 16, 16
    Cout, KH, KW = 8, 3, 3

    x = jax.random.normal(k_x, (N, Cin, H, W), dtype=jnp.float32)
    w = jax.random.normal(k_w, (KH, KW, Cin, Cout), dtype=jnp.float32) * 0.1
    bias = jax.random.normal(k_b, (Cout,), dtype=jnp.float32) * 0.1
    gamma = 1.0 + 0.1 * jax.random.normal(k_g, (Cout,), dtype=jnp.float32)
    beta = 0.1 * jax.random.normal(k_bt, (Cout,), dtype=jnp.float32)

    fwd = jax.jit(conv_bn_relu_forward)
    out = jax.block_until_ready(fwd(x, w, bias, gamma, beta))

    ref = jax.block_until_ready(reference_forward(x, w, bias, gamma, beta))
    assert out.shape == (N, Cout, H - KH + 1, W - KW + 1), out.shape
    max_err = float(jnp.max(jnp.abs(out - ref)))
    assert jnp.allclose(out, ref, atol=1e-4, rtol=1e-4), max_err

    print("KERNEL_OK")
</pallas_src>

<mosaic_0001>
module attributes {stable_mosaic.version = 11 : i64} {
  func.func @_fused_conv_bn_relu_kernel(%arg0: i32, %arg1: i32, %arg2: memref<32x64xf32, #tpu.memory_space<vmem>>, %arg3: memref<3x64x128xf32, #tpu.memory_space<vmem>>, %arg4: memref<1x8xf32, #tpu.memory_space<vmem>>, %arg5: memref<1x8xf32, #tpu.memory_space<vmem>>, %arg6: memref<128x8xf32, #tpu.memory_space<vmem>>, %arg7: memref<8x128xf32, #tpu.memory_space<vmem>>, %arg8: memref<32x128xf32, #tpu.memory_space<vmem>>, %arg9: memref<1x128xf32, #tpu.memory_space<vmem>>, %arg10: memref<1x128xf32, #tpu.memory_space<vmem>>, %arg11: memref<1x128xf32, #tpu.memory_space<vmem>>, %arg12: memref<1x128xf32, #tpu.memory_space<vmem>>) attributes {dimension_semantics = [#tpu.dimension_semantics<arbitrary>, #tpu.dimension_semantics<arbitrary>], iteration_bounds = array<i64: 2, 1>, scalar_prefetch = 0 : i64, scratch_operands = 4 : i64, tpu.core_type = #tpu.core_type<tc>, window_params = [{transform_indices = @transform_0, window_bounds = array<i64: 32, 64>}, {pipeline_mode = #tpu.pipeline_mode<synchronous>, transform_indices = @transform_1, window_bounds = array<i64: 3, 64, 128>}, {pipeline_mode = #tpu.pipeline_mode<synchronous>, transform_indices = @transform_2, window_bounds = array<i64: 1, 8>}, {pipeline_mode = #tpu.pipeline_mode<synchronous>, transform_indices = @transform_3, window_bounds = array<i64: 1, 8>}, {pipeline_mode = #tpu.pipeline_mode<synchronous>, transform_indices = @transform_4, window_bounds = array<i64: 128, 8>}, {pipeline_mode = #tpu.pipeline_mode<synchronous>, transform_indices = @transform_5, window_bounds = array<i64: 8, 128>}, {transform_indices = @transform_6, window_bounds = array<i64: 32, 128>}]} {
    %c0 = arith.constant 0 : index
    %c0_0 = arith.constant 0 : index
    %0 = vector.load %arg2[%c0, %c0_0] : memref<32x64xf32, #tpu.memory_space<vmem>>, vector<30x64xf32>
    %c0_1 = arith.constant 0 : index
    %c0_2 = arith.constant 0 : index
    %c0_3 = arith.constant 0 : index
    %1 = vector.load %arg3[%c0_1, %c0_2, %c0_3] : memref<3x64x128xf32, #tpu.memory_space<vmem>>, vector<1x64x128xf32>
    %2 = vector.shape_cast %1 : vector<1x64x128xf32> to vector<64x128xf32>
    %cst = arith.constant dense<0.000000e+00> : vector<30x128xf32>
    %3 = tpu.matmul %0, %2, %cst {dimension_numbers = #tpu.dot_dimension_numbers<[1], [0], [0], [1], [0, 0, 1, 1], [], []>} : vector<30x64xf32>, vector<64x128xf32>, vector<30x128xf32> -> vector<30x128xf32>
    %c1 = arith.constant 1 : index
    %c0_4 = arith.constant 0 : index
    %4 = vector.load %arg2[%c1, %c0_4] : memref<32x64xf32, #tpu.memory_space<vmem>>, vector<30x64xf32>
    %c1_5 = arith.constant 1 : index
    %c0_6 = arith.constant 0 : index
    %c0_7 = arith.constant 0 : index
    %5 = vector.load %arg3[%c1_5, %c0_6, %c0_7] : memref<3x64x128xf32, #tpu.memory_space<vmem>>, vector<1x64x128xf32>
    %6 = vector.shape_cast %5 : vector<1x64x128xf32> to vector<64x128xf32>
    %cst_8 = arith.constant dense<0.000000e+00> : vector<30x128xf32>
    %7 = tpu.matmul %4, %6, %cst_8 {dimension_numbers = #tpu.dot_dimension_numbers<[1], [0], [0], [1], [0, 0, 1, 1], [], []>} : vector<30x64xf32>, vector<64x128xf32>, vector<30x128xf32> -> vector<30x128xf32>
    %8 = arith.addf %3, %7 : vector<30x128xf32>
    %c2 = arith.constant 2 : index
    %c0_9 = arith.constant 0 : index
    %9 = vector.load %arg2[%c2, %c0_9] : memref<32x64xf32, #tpu.memory_space<vmem>>, vector<30x64xf32>
    %c2_10 = arith.constant 2 : index
    %c0_11 = arith.constant 0 : index
    %c0_12 = arith.constant 0 : index
    %10 = vector.load %arg3[%c2_10, %c0_11, %c0_12] : memref<3x64x128xf32, #tpu.memory_space<vmem>>, vector<1x64x128xf32>
    %11 = vector.shape_cast %10 : vector<1x64x128xf32> to vector<64x128xf32>
    %cst_13 = arith.constant dense<0.000000e+00> : vector<30x128xf32>
    %12 = tpu.matmul %9, %11, %cst_13 {dimension_numbers = #tpu.dot_dimension_numbers<[1], [0], [0], [1], [0, 0, 1, 1], [], []>} : vector<30x64xf32>, vector<64x128xf32>, vector<30x128xf32> -> vector<30x128xf32>
    %13 = arith.addf %8, %12 : vector<30x128xf32>
    %c0_i32 = arith.constant 0 : i32
    %14 = arith.cmpi eq, %arg0, %c0_i32 : i32
    %c0_i32_14 = arith.constant 0 : i32
    %15 = arith.cmpi eq, %arg1, %c0_i32_14 : i32
    %16 = arith.andi %14, %15 : i1
    %17 = arith.extui %16 : i1 to i32
    %c0_i32_15 = arith.constant 0 : i32
    %18 = arith.cmpi ne, %17, %c0_i32_15 : i32
    scf.if %18 {
      %cst_22 = arith.constant 0.000000e+00 : f32
      %30 = vector.broadcast %cst_22 : f32 to vector<1x128xf32>
      %c0_23 = arith.constant 0 : index
      %c0_24 = arith.constant 0 : index
      %31 = vector.load %arg9[%c0_23, %c0_24] : memref<1x128xf32, #tpu.memory_space<vmem>>, vector<1x128xf32>
      tpu.vector_store %arg9[%c0_23, %c0_24], %30 {strides = array<i32>} : memref<1x128xf32, #tpu.memory_space<vmem>>, vector<1x128xf32>,
      %cst_25 = arith.constant 0.000000e+00 : f32
      %32 = vector.broadcast %cst_25 : f32 to vector<1x128xf32>
      %c0_26 = arith.constant 0 : index
      %c0_27 = arith.constant 0 : index
      %33 = vector.load %arg10[%c0_26, %c0_27] : memref<1x128xf32, #tpu.memory_space<vmem>>, vector<1x128xf32>
      tpu.vector_store %arg10[%c0_26, %c0_27], %32 {strides = array<i32>} : memref<1x128xf32, #tpu.memory_space<vmem>>, vector<1x128xf32>,
    } else {
    }
    %c0_i32_16 = arith.constant 0 : i32
    %19 = arith.cmpi eq, %arg0, %c0_i32_16 : i32
    %20 = arith.extui %19 : i1 to i32
    %c0_i32_17 = arith.constant 0 : i32
    %21 = arith.cmpi ne, %20, %c0_i32_17 : i32
    scf.if %21 {
      %30 = tpu.iota {dimensions = array<i32: 0>} : vector<30x1xi32>
      %c16_i32 = arith.constant 16 : i32
      %c0_i32_22 = arith.constant 0 : i32
      %31 = arith.cmpi eq, %c16_i32, %c0_i32_22 : i32
      %c1_i32_23 = arith.constant 1 : i32
      %32 = arith.select %31, %c1_i32_23, %c16_i32 : i32
      %33 = vector.broadcast %32 : i32 to vector<30x1xi32>
      %34 = arith.remsi %30, %33 : vector<30x1xi32>
      %c0_i32_24 = arith.constant 0 : i32
      %35 = vector.broadcast %c0_i32_24 : i32 to vector<30x1xi32>
      %36 = arith.cmpi ne, %34, %35 : vector<30x1xi32>
      %c0_i32_25 = arith.constant 0 : i32
      %37 = vector.broadcast %c0_i32_25 : i32 to vector<30x1xi32>
      %38 = arith.cmpi slt, %34, %37 : vector<30x1xi32>
      %c0_i32_26 = arith.constant 0 : i32
      %39 = arith.cmpi slt, %32, %c0_i32_26 : i32
      %40 = vector.broadcast %39 : i1 to vector<30x1xi1>
      %41 = vector.broadcast %40 : vector<30x1xi1> to vector<30x1xi1>
      %42 = arith.xori %38, %41 : vector<30x1xi1>
      %43 = arith.andi %42, %36 : vector<30x1xi1>
      %44 = vector.broadcast %32 : i32 to vector<30x1xi32>
      %45 = arith.addi %34, %44 : vector<30x1xi32>
      %46 = arith.select %43, %45, %34 : vector<30x1xi1>, vector<30x1xi32>
      %c14_i32 = arith.constant 14 : i32
      %47 = vector.broadcast %c14_i32 : i32 to vector<30x1xi32>
      %48 = arith.cmpi slt, %46, %47 : vector<30x1xi32>
      %49 = arith.extui %48 : vector<30x1xi1> to vector<30x1xi32>
      %50 = arith.sitofp %49 : vector<30x1xi32> to vector<30x1xf32>
      %51 = vector.broadcast %50 : vector<30x1xf32> to vector<30x128xf32>
      %52 = arith.mulf %13, %51 : vector<30x128xf32>
      %c0_27 = arith.constant 0 : index
      %c0_28 = arith.constant 0 : index
      %53 = vector.load %arg9[%c0_27, %c0_28] : memref<1x128xf32, #tpu.memory_space<vmem>>, vector<1x128xf32>
      %cst_29 = arith.constant dense<0.000000e+00> : vector<128xf32>
      %54 = vector.multi_reduction <add>, %52, %cst_29 [0] : vector<30x128xf32> to vector<128xf32>
      %55 = vector.shape_cast %54 : vector<128xf32> to vector<1x128xf32>
      %56 = arith.addf %53, %55 : vector<1x128xf32>
      %c0_30 = arith.constant 0 : index
      %c0_31 = arith.constant 0 : index
      %57 = vector.load %arg9[%c0_30, %c0_31] : memref<1x128xf32, #tpu.memory_space<vmem>>, vector<1x128xf32>
      tpu.vector_store %arg9[%c0_30, %c0_31], %56 {strides = array<i32>} : memref<1x128xf32, #tpu.memory_space<vmem>>, vector<1x128xf32>,
      %c0_32 = arith.constant 0 : index
      %c0_33 = arith.constant 0 : index
      %58 = vector.load %arg10[%c0_32, %c0_33] : memref<1x128xf32, #tpu.memory_space<vmem>>, vector<1x128xf32>
      %59 = arith.mulf %52, %13 : vector<30x128xf32>
      %cst_34 = arith.constant dense<0.000000e+00> : vector<128xf32>
      %60 = vector.multi_reduction <add>, %59, %cst_34 [0] : vector<30x128xf32> to vector<128xf32>
      %61 = vector.shape_cast %60 : vector<128xf32> to vector<1x128xf32>
      %62 = arith.addf %58, %61 : vector<1x128xf32>
      %c0_35 = arith.constant 0 : index
      %c0_36 = arith.constant 0 : index
      %63 = vector.load %arg10[%c0_35, %c0_36] : memref<1x128xf32, #tpu.memory_space<vmem>>, vector<1x128xf32>
      tpu.vector_store %arg10[%c0_35, %c0_36], %62 {strides = array<i32>} : memref<1x128xf32, #tpu.memory_space<vmem>>, vector<1x128xf32>,
    } else {
    }
    %c1_i32 = arith.constant 1 : i32
    %22 = arith.cmpi eq, %arg0, %c1_i32 : i32
    %c0_i32_18 = arith.constant 0 : i32
    %23 = arith.cmpi eq, %arg1, %c0_i32_18 : i32
    %24 = arith.andi %22, %23 : i1
    %25 = arith.extui %24 : i1 to i32
    %c0_i32_19 = arith.constant 0 : i32
    %26 = arith.cmpi ne, %25, %c0_i32_19 : i32
    scf.if %26 {
      %c0_22 = arith.constant 0 : index
      %c0_23 = arith.constant 0 : index
      %30 = vector.load %arg9[%c0_22, %c0_23] : memref<1x128xf32, #tpu.memory_space<vmem>>, vector<1x128xf32>
      %c0_24 = arith.constant 0 : index
      %c0_25 = arith.constant 0 : index
      %31 = vector.load %arg6[%c0_24, %c0_25] : memref<128x8xf32, #tpu.memory_space<vmem>>, vector<128x8xf32>
      %cst_26 = arith.constant dense<0.000000e+00> : vector<1x8xf32>
      %32 = tpu.matmul %30, %31, %cst_26 {dimension_numbers = #tpu.dot_dimension_numbers<[1], [0], [0], [1], [0, 0, 1, 1], [], []>} : vector<1x128xf32>, vector<128x8xf32>, vector<1x8xf32> -> vector<1x8xf32>
      %c0_27 = arith.constant 0 : index
      %c0_28 = arith.constant 0 : index
      %33 = vector.load %arg10[%c0_27, %c0_28] : memref<1x128xf32, #tpu.memory_space<vmem>>, vector<1x128xf32>
      %c0_29 = arith.constant 0 : index
      %c0_30 = arith.constant 0 : index
      %34 = vector.load %arg6[%c0_29, %c0_30] : memref<128x8xf32, #tpu.memory_space<vmem>>, vector<128x8xf32>
      %cst_31 = arith.constant dense<0.000000e+00> : vector<1x8xf32>
      %35 = tpu.matmul %33, %34, %cst_31 {dimension_numbers = #tpu.dot_dimension_numbers<[1], [0], [0], [1], [0, 0, 1, 1], [], []>} : vector<1x128xf32>, vector<128x8xf32>, vector<1x8xf32> -> vector<1x8xf32>
      %cst_32 = arith.constant 0.00255102036 : f32
      %36 = vector.broadcast %cst_32 : f32 to vector<1x8xf32>
      %37 = arith.mulf %32, %36 : vector<1x8xf32>
      %cst_33 = arith.constant 0.00255102036 : f32
      %38 = vector.broadcast %cst_33 : f32 to vector<1x8xf32>
      %39 = arith.mulf %35, %38 : vector<1x8xf32>
      %40 = arith.mulf %37, %37 : vector<1x8xf32>
      %41 = arith.subf %39, %40 : vector<1x8xf32>
      %c0_34 = arith.constant 0 : index
      %c0_35 = arith.constant 0 : index
      %42 = vector.load %arg4[%c0_34, %c0_35] : memref<1x8xf32, #tpu.memory_space<vmem>>, vector<1x8xf32>
      %cst_36 = arith.constant 9.99999974E-6 : f32
      %43 = vector.broadcast %cst_36 : f32 to vector<1x8xf32>
      %44 = arith.addf %41, %43 : vector<1x8xf32>
      %45 = math.rsqrt %44 : vector<1x8xf32>
      %46 = arith.mulf %42, %45 : vector<1x8xf32>
      %c0_37 = arith.constant 0 : index
      %c0_38 = arith.constant 0 : index
      %47 = vector.load %arg5[%c0_37, %c0_38] : memref<1x8xf32, #tpu.memory_space<vmem>>, vector<1x8xf32>
      %48 = arith.mulf %37, %46 : vector<1x8xf32>
      %49 = arith.subf %47, %48 : vector<1x8xf32>
      %c0_39 = arith.constant 0 : index
      %c0_40 = arith.constant 0 : index
      %50 = vector.load %arg7[%c0_39, %c0_40] : memref<8x128xf32, #tpu.memory_space<vmem>>, vector<8x128xf32>
      %cst_41 = arith.constant dense<0.000000e+00> : vector<1x128xf32>
      %51 = tpu.matmul %46, %50, %cst_41 {dimension_numbers = #tpu.dot_dimension_numbers<[1], [0], [0], [1], [0, 0, 1, 1], [], []>} : vector<1x8xf32>, vector<8x128xf32>, vector<1x128xf32> -> vector<1x128xf32>
      %c0_42 = arith.constant 0 : index
      %c0_43 = arith.constant 0 : index
      %52 = vector.load %arg11[%c0_42, %c0_43] : memref<1x128xf32, #tpu.memory_space<vmem>>, vector<1x128xf32>
      tpu.vector_store %arg11[%c0_42, %c0_43], %51 {strides = array<i32>} : memref<1x128xf32, #tpu.memory_space<vmem>>, vector<1x128xf32>,
      %c0_44 = arith.constant 0 : index
      %c0_45 = arith.constant 0 : index
      %53 = vector.load %arg7[%c0_44, %c0_45] : memref<8x128xf32, #tpu.memory_space<vmem>>, vector<8x128xf32>
      %cst_46 = arith.constant dense<0.000000e+00> : vector<1x128xf32>
      %54 = tpu.matmul %49, %53, %cst_46 {dimension_numbers = #tpu.dot_dimension_numbers<[1], [0], [0], [1], [0, 0, 1, 1], [], []>} : vector<1x8xf32>, vector<8x128xf32>, vector<1x128xf32> -> vector<1x128xf32>
      %c0_47 = arith.constant 0 : index
      %c0_48 = arith.constant 0 : index
      %55 = vector.load %arg12[%c0_47, %c0_48] : memref<1x128xf32, #tpu.memory_space<vmem>>, vector<1x128xf32>
      tpu.vector_store %arg12[%c0_47, %c0_48], %54 {strides = array<i32>} : memref<1x128xf32, #tpu.memory_space<vmem>>, vector<1x128xf32>,
    } else {
    }
    %c1_i32_20 = arith.constant 1 : i32
    %27 = arith.cmpi eq, %arg0, %c1_i32_20 : i32
    %28 = arith.extui %27 : i1 to i32
    %c0_i32_21 = arith.constant 0 : i32
    %29 = arith.cmpi ne, %28, %c0_i32_21 : i32
    scf.if %29 {
      %c0_22 = arith.constant 0 : index
      %c0_23 = arith.constant 0 : index
      %30 = vector.load %arg11[%c0_22, %c0_23] : memref<1x128xf32, #tpu.memory_space<vmem>>, vector<1x128xf32>
      %31 = vector.broadcast %30 : vector<1x128xf32> to vector<30x128xf32>
      %32 = arith.mulf %13, %31 : vector<30x128xf32>
      %c0_24 = arith.constant 0 : index
      %c0_25 = arith.constant 0 : index
      %33 = vector.load %arg12[%c0_24, %c0_25] : memref<1x128xf32, #tpu.memory_space<vmem>>, vector<1x128xf32>
      %34 = vector.broadcast %33 : vector<1x128xf32> to vector<30x128xf32>
      %35 = arith.addf %32, %34 : vector<30x128xf32>
      %cst_26 = arith.constant 0.000000e+00 : f32
      %36 = vector.broadcast %cst_26 : f32 to vector<30x128xf32>
      %37 = arith.maximumf %35, %36 : vector<30x128xf32>
      %c0_27 = arith.constant 0 : index
      %c0_28 = arith.constant 0 : index
      %38 = vector.load %arg8[%c0_27, %c0_28] : memref<32x128xf32, #tpu.memory_space<vmem>>, vector<30x128xf32>
      tpu.vector_store %arg8[%c0_27, %c0_28], %37 {strides = array<i32>} : memref<32x128xf32, #tpu.memory_space<vmem>>, vector<30x128xf32>,
      %cst_29 = arith.constant 0.000000e+00 : f32
      %39 = vector.broadcast %cst_29 : f32 to vector<2x128xf32>
      %c30 = arith.constant 30 : index
      %c0_30 = arith.constant 0 : index
      %40 = vector.load %arg8[%c30, %c0_30] : memref<32x128xf32, #tpu.memory_space<vmem>>, vector<2x128xf32>
      tpu.vector_store %arg8[%c30, %c0_30], %39 {strides = array<i32>} : memref<32x128xf32, #tpu.memory_space<vmem>>, vector<2x128xf32>,
    } else {
    }
    return
  }
  func.func @transform_0(%arg0: i32, %arg1: i32) -> (i32, i32) {
    %c0_i32 = arith.constant 0 : i32
    %c0_i32_0 = arith.constant 0 : i32
    return %arg1, %c0_i32 : i32, i32
  }
  func.func @transform_1(%arg0: i32, %arg1: i32) -> (i32, i32, i32) {
    %c0_i32 = arith.constant 0 : i32
    %c0_i32_0 = arith.constant 0 : i32
    %c0_i32_1 = arith.constant 0 : i32
    %c0_i32_2 = arith.constant 0 : i32
    return %c0_i32, %c0_i32_0, %c0_i32_1 : i32, i32, i32
  }
  func.func @transform_2(%arg0: i32, %arg1: i32) -> (i32, i32) {
    %c0_i32 = arith.constant 0 : i32
    %c0_i32_0 = arith.constant 0 : i32
    %c0_i32_1 = arith.constant 0 : i32
    return %c0_i32, %c0_i32_0 : i32, i32
  }
  func.func @transform_3(%arg0: i32, %arg1: i32) -> (i32, i32) {
    %c0_i32 = arith.constant 0 : i32
    %c0_i32_0 = arith.constant 0 : i32
    %c0_i32_1 = arith.constant 0 : i32
    return %c0_i32, %c0_i32_0 : i32, i32
  }
  func.func @transform_4(%arg0: i32, %arg1: i32) -> (i32, i32) {
    %c0_i32 = arith.constant 0 : i32
    %c0_i32_0 = arith.constant 0 : i32
    %c0_i32_1 = arith.constant 0 : i32
    return %c0_i32, %c0_i32_0 : i32, i32
  }
  func.func @transform_5(%arg0: i32, %arg1: i32) -> (i32, i32) {
    %c0_i32 = arith.constant 0 : i32
    %c0_i32_0 = arith.constant 0 : i32
    %c0_i32_1 = arith.constant 0 : i32
    return %c0_i32, %c0_i32_0 : i32, i32
  }
  func.func @transform_6(%arg0: i32, %arg1: i32) -> (i32, i32) {
    %0 = arith.muli %arg1, %arg0 : i32
    %c0_i32 = arith.constant 0 : i32
    %c0_i32_0 = arith.constant 0 : i32
    return %0, %c0_i32 : i32, i32
  }
}

</mosaic_0001>

<llo_original>
// kernel: conv_bn_relu_forward.1
$region0: #{conv_bn_relu_forward.1}
  #allocation0 [shape = 'u32[]', space=smem, size = 0x4, offset = 0x4, fixed_abs, tag = 'smem constant byte address 0x4 - core index']
  #allocation1 [shape = 'u32[144,128]{1,0:T(1,128)}', space=vmem, size = 0x12000, scoped, tag = 'internal scratch']
  #allocation2 [shape = 'f32[1,128]{1,0:T(1,128)}', space=vmem, size = 0x200, scoped, tag = 'scratch operand']
  #allocation3 [shape = 'f32[1,128]{1,0:T(1,128)}', space=vmem, size = 0x200, scoped, tag = 'scratch operand']
  #allocation4 [shape = 'f32[1,128]{1,0:T(1,128)}', space=vmem, size = 0x200, scoped, tag = 'scratch operand']
  #allocation5 [shape = 'f32[1,128]{1,0:T(1,128)}', space=vmem, size = 0x200, scoped, tag = 'scratch operand']
  %s0 = inlined_call_operand.vmem [shape: f32[32,64], index: 0, kind: input, shape index: {}]
  %s1 = inlined_call_operand.vmem [shape: f32[3,64,128], index: 1, kind: input, shape index: {}]
  %s2 = inlined_call_operand.vmem [shape: f32[1,8], index: 2, kind: input, shape index: {}]
  %s3 = inlined_call_operand.vmem [shape: f32[1,8], index: 3, kind: input, shape index: {}]
  %s4 = inlined_call_operand.vmem [shape: f32[128,8], index: 4, kind: input, shape index: {}]
  %s5 = inlined_call_operand.vmem [shape: f32[8,128], index: 5, kind: input, shape index: {}]
  %s6 = inlined_call_operand.vmem [shape: f32[32,128], index: 6, kind: output, shape index: {}]
  %s7 = sld [smem:[#allocation0]]
  $region73: #{conv_bn_relu_forward.1} parent=0
    _
  %s9 = ssub.s32 1, %s7
  %s10 = scalar_select 0, %s9, %s7
  loop: start=0, step=1, limit=4
  $region2: #{conv_bn_relu_forward.1} parent=0 // loop_pre_header
    _
  $region3: #{conv_bn_relu_forward.1} parent=0 // loop_header
    %s12 = sphi 0, %s16
    %p13 = scmp.ge.s32.totalorder %s12, 4
    %s19 = sphi 0, %s31
    %s20 = sphi 0, %s27
    %s21 = sphi 0, %s19
    %s22 = sphi 0, %s20
    %s23 = sphi 0, %s21
    %s24 = sphi 0, %s22
    %s34 = sphi 0, %s36
    %s37 = sphi 0, %s34
    %s38 = sphi 0, %s37
    %s54 = sphi 0, %s38
    %s58 = sphi 0, %s58
    %s60 = sphi 0, %s58
    %s61 = sphi 0, %s60
    %s75 = sphi 0, %s61
    %s79 = sphi 0, %s79
    %s81 = sphi 0, %s79
    %s82 = sphi 0, %s81
    %s96 = sphi 0, %s82
    %s100 = sphi 0, %s100
    %s102 = sphi 0, %s100
    %s103 = sphi 0, %s102
    %s117 = sphi 0, %s103
    %s121 = sphi 0, %s121
    %s123 = sphi 0, %s121
    %s124 = sphi 0, %s123
    %s138 = sphi 0, %s124
    %s142 = sphi 0, %s142
    %s144 = sphi 0, %s142
    %s145 = sphi 0, %s144
    %s159 = sphi 0, %s145
    %s167 = sphi 0, %s169
    %s170 = sphi 0, %s167
    %s171 = sphi 0, %s170
    %s187 = sphi 0, %s171
  $region4: #{conv_bn_relu_forward.1} parent=0 // loop_header_branch
    %15 = sbr.rel (%p13) target = $region8
  $region5: #{conv_bn_relu_forward.1} parent=0 // loop_body
    %s17 = ssub.s32 %s12, 1
    %s18 = ssub.s32 %s12, 2
    %s25 = sadd.s32 1, %s20
    %p26 = scmp.ge.s32.totalorder %s25, 1
    %s27 = scalar_select %p26, 0, %s25
    %s28 = sadd.s32 1, %s19
    %s29 = scalar_select %p26, %s28, %s19
    %p30 = scmp.ge.s32.totalorder %s29, 2
    %s31 = scalar_select %p30, 0, %s29
    %s32 = ssub.s32 %s20, %s27
    %p33 = scmp.eq.s32.totalorder %s32, 0
    %s35 = sadd.s32 %s34, 1
    %s36 = scalar_select %p33, %s34, %s35
    %p39 = pneg %p33
    %p40 = scmp.eq.s32.totalorder %s12, 1
    %p41 = por %p39, %p40
    %p42 = scmp.ne.s32.totalorder %s34, %s37
    %p43 = scmp.eq.s32.totalorder %s12, 0
    %p44 = por %p42, %p43
    %p45 = scmp.ne.s32.totalorder %s34, %s37
    %p46 = scmp.eq.s32.totalorder %s17, 1
    %p47 = por %p45, %p46
    %p48 = scmp.ne.s32.totalorder %s37, %s38
    %p49 = scmp.eq.s32.totalorder %s17, 0
    %p50 = por %p48, %p49
    %p51 = scmp.ne.s32.totalorder %s37, %s38
    %p52 = scmp.eq.s32.totalorder %s18, 1
    %p53 = por %p51, %p52
    %p55 = scmp.ne.s32.totalorder %s38, %s54
    %p56 = scmp.eq.s32.totalorder %s18, 0
    %p57 = por %p55, %p56
    %s59 = sadd.s32 %s58, 1
    %p62 = scmp.eq.s32.totalorder %s12, 1
    %p63 = scmp.ne.s32.totalorder %s58, %s60
    %p64 = scmp.eq.s32.totalorder %s12, 0
    %p65 = por %p63, %p64
    %p66 = scmp.ne.s32.totalorder %s58, %s60
    %p67 = scmp.eq.s32.totalorder %s17, 1
    %p68 = por %p66, %p67
    %p69 = scmp.ne.s32.totalorder %s60, %s61
    %p70 = scmp.eq.s32.totalorder %s17, 0
    %p71 = por %p69, %p70
    %p72 = scmp.ne.s32.totalorder %s60, %s61
    %p73 = scmp.eq.s32.totalorder %s18, 1
    %p74 = por %p72, %p73
    %p76 = scmp.ne.s32.totalorder %s61, %s75
    %p77 = scmp.eq.s32.totalorder %s18, 0
    %p78 = por %p76, %p77
    %s80 = sadd.s32 %s79, 1
    %p83 = scmp.eq.s32.totalorder %s12, 1
    %p84 = scmp.ne.s32.totalorder %s79, %s81
    %p85 = scmp.eq.s32.totalorder %s12, 0
    %p86 = por %p84, %p85
    %p87 = scmp.ne.s32.totalorder %s79, %s81
    %p88 = scmp.eq.s32.totalorder %s17, 1
    %p89 = por %p87, %p88
    %p90 = scmp.ne.s32.totalorder %s81, %s82
    %p91 = scmp.eq.s32.totalorder %s17, 0
    %p92 = por %p90, %p91
    %p93 = scmp.ne.s32.totalorder %s81, %s82
    %p94 = scmp.eq.s32.totalorder %s18, 1
    %p95 = por %p93, %p94
    %p97 = scmp.ne.s32.totalorder %s82, %s96
    %p98 = scmp.eq.s32.totalorder %s18, 0
    %p99 = por %p97, %p98
    %s101 = sadd.s32 %s100, 1
    %p104 = scmp.eq.s32.totalorder %s12, 1
    %p105 = scmp.ne.s32.totalorder %s100, %s102
    %p106 = scmp.eq.s32.totalorder %s12, 0
    %p107 = por %p105, %p106
    %p108 = scmp.ne.s32.totalorder %s100, %s102
    %p109 = scmp.eq.s32.totalorder %s17, 1
    %p110 = por %p108, %p109
    %p111 = scmp.ne.s32.totalorder %s102, %s103
    %p112 = scmp.eq.s32.totalorder %s17, 0
    %p113 = por %p111, %p112
    %p114 = scmp.ne.s32.totalorder %s102, %s103
    %p115 = scmp.eq.s32.totalorder %s18, 1
    %p116 = por %p114, %p115
    %p118 = scmp.ne.s32.totalorder %s103, %s117
    %p119 = scmp.eq.s32.totalorder %s18, 0
    %p120 = por %p118, %p119
    %s122 = sadd.s32 %s121, 1
    %p125 = scmp.eq.s32.totalorder %s12, 1
    %p126 = scmp.ne.s32.totalorder %s121, %s123
    %p127 = scmp.eq.s32.totalorder %s12, 0
    %p128 = por %p126, %p127
    %p129 = scmp.ne.s32.totalorder %s121, %s123
    %p130 = scmp.eq.s32.totalorder %s17, 1
    %p131 = por %p129, %p130
    %p132 = scmp.ne.s32.totalorder %s123, %s124
    %p133 = scmp.eq.s32.totalorder %s17, 0
    %p134 = por %p132, %p133
    %p135 = scmp.ne.s32.totalorder %s123, %s124
    %p136 = scmp.eq.s32.totalorder %s18, 1
    %p137 = por %p135, %p136
    %p139 = scmp.ne.s32.totalorder %s124, %s138
    %p140 = scmp.eq.s32.totalorder %s18, 0
    %p141 = por %p139, %p140
    %s143 = sadd.s32 %s142, 1
    %p146 = scmp.eq.s32.totalorder %s12, 1
    %p147 = scmp.ne.s32.totalorder %s142, %s144
    %p148 = scmp.eq.s32.totalorder %s12, 0
    %p149 = por %p147, %p148
    %p150 = scmp.ne.s32.totalorder %s142, %s144
    %p151 = scmp.eq.s32.totalorder %s17, 1
    %p152 = por %p150, %p151
    %p153 = scmp.ne.s32.totalorder %s144, %s145
    %p154 = scmp.eq.s32.totalorder %s17, 0
    %p155 = por %p153, %p154
    %p156 = scmp.ne.s32.totalorder %s144, %s145
    %p157 = scmp.eq.s32.totalorder %s18, 1
    %p158 = por %p156, %p157
    %p160 = scmp.ne.s32.totalorder %s145, %s159
    %p161 = scmp.eq.s32.totalorder %s18, 0
    %p162 = por %p160, %p161
    %s163 = smul.u32 %s20, %s19
    %s164 = smul.u32 %s27, %s31
    %s165 = ssub.s32 %s163, %s164
    %p166 = scmp.eq.s32.totalorder %s165, 0
    %s168 = sadd.s32 %s167, 1
    %s169 = scalar_select %p166, %s167, %s168
    %p172 = pneg %p166
    %p173 = scmp.eq.s32.totalorder %s12, 1
    %p174 = por %p172, %p173
    %p175 = scmp.ne.s32.totalorder %s167, %s170
    %p176 = scmp.eq.s32.totalorder %s12, 0
    %p177 = por %p175, %p176
    %p178 = scmp.ne.s32.totalorder %s167, %s170
    %p179 = scmp.eq.s32.totalorder %s17, 1
    %p180 = por %p178, %p179
    %p181 = scmp.ne.s32.totalorder %s170, %s171
    %p182 = scmp.eq.s32.totalorder %s17, 0
    %p183 = por %p181, %p182
    %p184 = scmp.ne.s32.totalorder %s170, %s171
    %p185 = scmp.eq.s32.totalorder %s18, 1
    %p186 = por %p184, %p185
    %p188 = scmp.ne.s32.totalorder %s171, %s187
    %p189 = scmp.eq.s32.totalorder %s18, 0
    %p190 = por %p188, %p189
    %p191 = scmp.le.s32.totalorder 1, %s12
    %p192 = scmp.lt.s32.totalorder %s12, 3
    %p193 = pnand %p191, %p192
    %p194 = pneg %p193
    // Predicated region
    $region9: #{conv_bn_relu_forward.1} parent=5 // pred_check
      _
    $region10: #{conv_bn_relu_forward.1} parent=5 // pred_check_branch
      %196 = sbr.rel (%p193) target = $region12
    $region11: #{conv_bn_relu_forward.1} parent=5 // pred_region
      %s197 = ssub.s32 %s12, 1
      // Predicated region
      $region13: #{conv_bn_relu_forward.1} parent=11 // pred_check
        %p198 = pneg %p50
      $region14: #{conv_bn_relu_forward.1} parent=11 // pred_check_branch
        %200 = sbr.rel (%p198) target = $region16
      $region15: #{conv_bn_relu_forward.1} parent=11 // pred_region
        %s201 = smul.u32 4, %s22
        %p202 = scmp.lt.s32.totalorder %s201, 3
        %s203 = scalar_select %p202, %s201, 3
        %s204 = smul.addr %s203, 8
        %s205 = scalar_lea.vmem %s0, %s204
        %s206 = smul.u32 4, %s22
      $region16: #{conv_bn_relu_forward.1} parent=11 // pred_fallthru
        _
      // Predicated region
      $region17: #{conv_bn_relu_forward.1} parent=11 // pred_check
        %p207 = pneg %p71
      $region18: #{conv_bn_relu_forward.1} parent=11 // pred_check_branch
        %209 = sbr.rel (%p207) target = $region20
      $region19: #{conv_bn_relu_forward.1} parent=11 // pred_region
        _
      $region20: #{conv_bn_relu_forward.1} parent=11 // pred_fallthru
        _
      // Predicated region
      $region21: #{conv_bn_relu_forward.1} parent=11 // pred_check
        %p210 = pneg %p92
      $region22: #{conv_bn_relu_forward.1} parent=11 // pred_check_branch
        %212 = sbr.rel (%p210) target = $region24
      $region23: #{conv_bn_relu_forward.1} parent=11 // pred_region
        _
      $region24: #{conv_bn_relu_forward.1} parent=11 // pred_fallthru
        _
      // Predicated region
      $region25: #{conv_bn_relu_forward.1} parent=11 // pred_check
        %p213 = pneg %p113
      $region26: #{conv_bn_relu_forward.1} parent=11 // pred_check_branch
        %215 = sbr.rel (%p213) target = $region28
      $region27: #{conv_bn_relu_forward.1} parent=11 // pred_region
        _
      $region28: #{conv_bn_relu_forward.1} parent=11 // pred_fallthru
        _
      // Predicated region
      $region29: #{conv_bn_relu_forward.1} parent=11 // pred_check
        %p216 = pneg %p134
      $region30: #{conv_bn_relu_forward.1} parent=11 // pred_check_branch
        %218 = sbr.rel (%p216) target = $region32
      $region31: #{conv_bn_relu_forward.1} parent=11 // pred_region
        _
      $region32: #{conv_bn_relu_forward.1} parent=11 // pred_fallthru
        _
      // Predicated region
      $region33: #{conv_bn_relu_forward.1} parent=11 // pred_check
        %p219 = pneg %p155
      $region34: #{conv_bn_relu_forward.1} parent=11 // pred_check_branch
        %221 = sbr.rel (%p219) target = $region36
      $region35: #{conv_bn_relu_forward.1} parent=11 // pred_region
        _
      $region36: #{conv_bn_relu_forward.1} parent=11 // pred_fallthru
        _
    $region12: #{conv_bn_relu_forward.1} parent=5 // pred_fallthru
      _
    %p222 = scmp.lt.s32.totalorder %s12, 2
    // Predicated region
    $region37: #{conv_bn_relu_forward.1} parent=5 // pred_check
      %p223 = pneg %p222
    $region38: #{conv_bn_relu_forward.1} parent=5 // pred_check_branch
      %225 = sbr.rel (%p223) target = $region40
    $region39: #{conv_bn_relu_forward.1} parent=5 // pred_region
      _
    $region40: #{conv_bn_relu_forward.1} parent=5 // pred_fallthru
      _
    %p226 = scmp.le.s32.totalorder 1, %s12
    %p227 = scmp.lt.s32.totalorder %s12, 3
    %p228 = pnand %p226, %p227
    %p229 = pneg %p228
    // Predicated region
    $region41: #{conv_bn_relu_forward.1} parent=5 // pred_check
      _
    $region42: #{conv_bn_relu_forward.1} parent=5 // pred_check_branch
      %231 = sbr.rel (%p228) target = $region44
    $region43: #{conv_bn_relu_forward.1} parent=5 // pred_region
      %s232 = ssub.s32 %s12, 1
      %s233 = smul.u32 4, %s22
      %p234 = scmp.lt.s32.totalorder %s233, 3
      %s235 = scalar_select %p234, %s233, 3
      %s236 = smul.addr %s235, 8
      %s237 = scalar_lea.vmem %s0, %s236
      %p238 = pneg %p50
      %p239 = pneg %p47
      %p240 = pneg %p71
      %p241 = pneg %p68
      %p242 = pneg %p92
      %p243 = pneg %p89
      %p244 = pneg %p113
      %p245 = pneg %p110
      %p246 = pneg %p134
      %p247 = pneg %p131
      %p248 = pneg %p155
      %p249 = pneg %p152
      %p250 = pneg %p183
      %p251 = pneg %p180
      %s252 = smul.u32 %s22, %s21
      %s253 = smul.u32 4, %s252
      %p254 = scmp.lt.s32.totalorder %s253, 3
      %s255 = scalar_select %p254, %s253, 3
      %s256 = smul.addr %s255, 8
      %s257 = scalar_lea.vmem %s6, %s256
      %s258 = smul.u32 4, %s22
      %p259 = scmp.lt.s32.totalorder %s258, 3
      %s260 = scalar_select %p259, %s258, 3
      %s261 = smul.addr %s260, 8
      %s262 = scalar_lea.vmem %s0, %s261
      %s263 = smul.u32 4, %s22
      %s264 = smul.u32 %s22, %s21
      %s265 = smul.u32 4, %s264
      %p266 = scmp.lt.s32.totalorder %s265, 3
      %s267 = scalar_select %p266, %s265, 3
      %s268 = smul.addr %s267, 8
      %s269 = scalar_lea.vmem %s6, %s268
      %s270 = smul.u32 %s22, %s21
      %s271 = smul.u32 4, %s270
      %v272 = vld [vmem:[%s262] sm:$0xff]
      %v273 = vld [vmem:[%s262 + $0x8] sm:$0xff]
      %v274 = vld [vmem:[%s262 + $0x10] sm:$0xff]
      %v275 = vld [vmem:[%s262 + $0x18] sm:$0x3f]
      %v276 = vld [vmem:[%s1] sm:$0xff]
      %v277 = vld [vmem:[%s1 + $0x8] sm:$0xff]
      %v278 = vld [vmem:[%s1 + $0x10] sm:$0xff]
      %v279 = vld [vmem:[%s1 + $0x18] sm:$0xff]
      %v280 = vld [vmem:[%s1 + $0x20] sm:$0xff]
      %v281 = vld [vmem:[%s1 + $0x28] sm:$0xff]
      %v282 = vld [vmem:[%s1 + $0x30] sm:$0xff]
      %v283 = vld [vmem:[%s1 + $0x38] sm:$0xff]
      %v284 = vld [vmem:[%s262 + $0x1] sm:$0xff]
      %v285 = vld [vmem:[%s262 + $0x9] sm:$0xff]
      %v286 = vld [vmem:[%s262 + $0x11] sm:$0xff]
      %v287 = vld [vmem:[%s262 + $0x19] sm:$0x3f]
      %s288 = scalar_lea.vmem %s1, 64
      %v289 = vld [vmem:[%s288] sm:$0xff]
      %v290 = vld [vmem:[%s288 + $0x8] sm:$0xff]
      %v291 = vld [vmem:[%s288 + $0x10] sm:$0xff]
      %v292 = vld [vmem:[%s288 + $0x18] sm:$0xff]
      %v293 = vld [vmem:[%s288 + $0x20] sm:$0xff]
      %v294 = vld [vmem:[%s288 + $0x28] sm:$0xff]
      %v295 = vld [vmem:[%s288 + $0x30] sm:$0xff]
      %v296 = vld [vmem:[%s288 + $0x38] sm:$0xff]
      %vm297 = vcmask 523264
      %v299 = vsel %vm297, %v284, 0
      %v302 = vsel %vm297, %v285, 0
      %v305 = vsel %vm297, %v286, 0
      %v308 = vsel %vm297, %v287, 0
      %310 = vmatprep.subr.mxu0 0.0
      %311 = vmatpush1.msra.mxu0 %v289
      %312 = vmatprep.subr.mxu0 0.0
      %313 = vmatpush1.msra.mxu0 %v290
      %314 = vmatprep.subr.mxu0 0.0
      %315 = vmatpush1.msra.mxu0 %v291
      %316 = vmatprep.subr.mxu0 0.0
      %317 = vmatpush1.msra.mxu0 %v292
      %318 = vmatprep.subr.mxu0 0.0
      %319 = vmatpush1.msra.mxu0 %v293
      %320 = vmatprep.subr.mxu0 0.0
      %321 = vmatpush1.msra.mxu0 %v294
      %322 = vmatprep.subr.mxu0 0.0
      %323 = vmatpush1.msra.mxu0 %v295
      %324 = vmatprep.subr.mxu0 0.0
      %325 = vmatpush1.msra.mxu0 %v296
      %326 = vmatprep.subr.mxu0 0.0
      %327 = vmatpush1.msra.mxu0 0.0
      %328 = vmatprep.subr.mxu0 0.0
      %329 = vmatpush1.msra.mxu0 0.0
      %330 = vmatprep.subr.mxu0 0.0
      %331 = vmatpush1.msra.mxu0 0.0
      %332 = vmatprep.subr.mxu0 0.0
      %333 = vmatpush1.msra.mxu0 0.0
      %334 = vmatprep.subr.mxu0 0.0
      %335 = vmatpush1.msra.mxu0 0.0
      %336 = vmatprep.subr.mxu0 0.0
      %337 = vmatpush1.msra.mxu0 0.0
      %338 = vmatprep.subr.mxu0 0.0
      %339 = vmatpush1.msra.mxu0 0.0
      %340 = vmatprep.subr.mxu0 0.0
      %341 = vmatpush1.msra.mxu0 0.0
      %342 = vmatprep.subr.mxu0 0.0
      %343 = vmatpush1.msra.mxu0 0.0
      %344 = vmatprep.subr.mxu0 0.0
      %345 = vmatpush1.msra.mxu0 0.0
      %346 = vmatprep.subr.mxu0 0.0
      %347 = vmatpush1.msra.mxu0 0.0
      %348 = vmatprep.subr.mxu0 0.0
      %349 = vmatpush1.msra.mxu0 0.0
      %350 = vmatprep.subr.mxu0 0.0
      %351 = vmatpush1.msra.mxu0 0.0
      %352 = vmatprep.subr.mxu0 0.0
      %353 = vmatpush1.msra.mxu0 0.0
      %354 = vmatprep.subr.mxu0 0.0
      %355 = vmatpush1.msra.mxu0 0.0
      %356 = vmatprep.subr.mxu0 0.0
      %357 = vmatpush1.msra.mxu0 0.0
      %358 = vmatprep.subr.mxu0 0.0
      %359 = vmatpush1.msra.mxu0 0.0
      %360 = vmatprep.subr.mxu0 0.0
      %361 = vmatpush1.msra.mxu0 0.0
      %362 = vmatprep.subr.mxu0 0.0
      %363 = vmatpush1.msra.mxu0 0.0
      %364 = vmatprep.subr.mxu0 0.0
      %365 = vmatpush1.msra.mxu0 0.0
      %366 = vmatprep.subr.mxu0 0.0
      %367 = vmatpush1.msra.mxu0 0.0
      %368 = vmatprep.subr.mxu0 0.0
      %369 = vmatpush1.msra.mxu0 0.0
      %370 = vmatprep.subr.mxu0 0.0
      %371 = vmatpush1.msra.mxu0 0.0
      %372 = vmatprep.subr.mxu0 0.0
      %373 = vmatpush1.msra.mxu0 0.0
      %374 = vmatprep.mubr.f32.mxu0 0.0
      %375 = vmatmul.mubr.f32.gmra.mrb[0].mxu0 %v299
      %v376 = vpop.f32.mrb[0].mxu0
      %v377 = vadd.f32 0.0, %v376
      %v378 = vpop.f32.mrb[0].mxu0
      %379 = vmatprep.mubr.f32.mxu0 0.0
      %380 = vmatmul.mubr.f32.gmra.mrb[0].mxu0 %v302
      %v381 = vpop.f32.mrb[0].mxu0
      %v382 = vadd.f32 0.0, %v381
      %v383 = vpop.f32.mrb[0].mxu0
      %384 = vmatprep.mubr.f32.mxu0 0.0
      %385 = vmatmul.mubr.f32.gmra.mrb[0].mxu0 %v305
      %v386 = vpop.f32.mrb[0].mxu0
      %v387 = vadd.f32 0.0, %v386
      %v388 = vpop.f32.mrb[0].mxu0
      %389 = vmatprep.mubr.f32.mxu0 0.0
      %390 = vmatmul.mubr.f32.gmra.mrb[0].mxu0 %v308
      %v391 = vpop.f32.mrb[0].mxu0
      %v392 = vadd.f32 0.0, %v391
      %v393 = vpop.f32.mrb[0].mxu0
      %394 = vdwg.mxu0
      %v396 = vsel %vm297, %v272, 0
      %v399 = vsel %vm297, %v273, 0
      %v402 = vsel %vm297, %v274, 0
      %v405 = vsel %vm297, %v275, 0
      %407 = vmatprep.subr.mxu0 0.0
      %408 = vmatpush1.msra.mxu0 %v276
      %409 = vmatprep.subr.mxu0 0.0
      %410 = vmatpush1.msra.mxu0 %v277
      %411 = vmatprep.subr.mxu0 0.0
      %412 = vmatpush1.msra.mxu0 %v278
      %413 = vmatprep.subr.mxu0 0.0
      %414 = vmatpush1.msra.mxu0 %v279
      %415 = vmatprep.subr.mxu0 0.0
      %416 = vmatpush1.msra.mxu0 %v280
      %417 = vmatprep.subr.mxu0 0.0
      %418 = vmatpush1.msra.mxu0 %v281
      %419 = vmatprep.subr.mxu0 0.0
      %420 = vmatpush1.msra.mxu0 %v282
      %421 = vmatprep.subr.mxu0 0.0
      %422 = vmatpush1.msra.mxu0 %v283
      %423 = vmatprep.subr.mxu0 0.0
      %424 = vmatpush1.msra.mxu0 0.0
      %425 = vmatprep.subr.mxu0 0.0
      %426 = vmatpush1.msra.mxu0 0.0
      %427 = vmatprep.subr.mxu0 0.0
      %428 = vmatpush1.msra.mxu0 0.0
      %429 = vmatprep.subr.mxu0 0.0
      %430 = vmatpush1.msra.mxu0 0.0
      %431 = vmatprep.subr.mxu0 0.0
      %432 = vmatpush1.msra.mxu0 0.0
      %433 = vmatprep.subr.mxu0 0.0
      %434 = vmatpush1.msra.mxu0 0.0
      %435 = vmatprep.subr.mxu0 0.0
      %436 = vmatpush1.msra.mxu0 0.0
      %437 = vmatprep.subr.mxu0 0.0
      %438 = vmatpush1.msra.mxu0 0.0
      %439 = vmatprep.subr.mxu0 0.0
      %440 = vmatpush1.msra.mxu0 0.0
      %441 = vmatprep.subr.mxu0 0.0
      %442 = vmatpush1.msra.mxu0 0.0
      %443 = vmatprep.subr.mxu0 0.0
      %444 = vmatpush1.msra.mxu0 0.0
      %445 = vmatprep.subr.mxu0 0.0
      %446 = vmatpush1.msra.mxu0 0.0
      %447 = vmatprep.subr.mxu0 0.0
      %448 = vmatpush1.msra.mxu0 0.0
      %449 = vmatprep.subr.mxu0 0.0
      %450 = vmatpush1.msra.mxu0 0.0
      %451 = vmatprep.subr.mxu0 0.0
      %452 = vmatpush1.msra.mxu0 0.0
      %453 = vmatprep.subr.mxu0 0.0
      %454 = vmatpush1.msra.mxu0 0.0
      %455 = vmatprep.subr.mxu0 0.0
      %456 = vmatpush1.msra.mxu0 0.0
      %457 = vmatprep.subr.mxu0 0.0
      %458 = vmatpush1.msra.mxu0 0.0
      %459 = vmatprep.subr.mxu0 0.0
      %460 = vmatpush1.msra.mxu0 0.0
      %461 = vmatprep.subr.mxu0 0.0
      %462 = vmatpush1.msra.mxu0 0.0
      %463 = vmatprep.subr.mxu0 0.0
      %464 = vmatpush1.msra.mxu0 0.0
      %465 = vmatprep.subr.mxu0 0.0
      %466 = vmatpush1.msra.mxu0 0.0
      %467 = vmatprep.subr.mxu0 0.0
      %468 = vmatpush1.msra.mxu0 0.0
      %469 = vmatprep.subr.mxu0 0.0
      %470 = vmatpush1.msra.mxu0 0.0
      %471 = vmatprep.mubr.f32.mxu0 0.0
      %472 = vmatmul.mubr.f32.gmra.mrb[0].mxu0 %v396
      %v473 = vpop.f32.mrb[0].mxu0
      %v474 = vadd.f32 %v377, %v473
      %v475 = vpop.f32.mrb[0].mxu0
      %476 = vmatprep.mubr.f32.mxu0 0.0
      %477 = vmatmul.mubr.f32.gmra.mrb[0].mxu0 %v399
      %v478 = vpop.f32.mrb[0].mxu0
      %v479 = vadd.f32 %v382, %v478
      %v480 = vpop.f32.mrb[0].mxu0
      %481 = vmatprep.mubr.f32.mxu0 0.0
      %482 = vmatmul.mubr.f32.gmra.mrb[0].mxu0 %v402
      %v483 = vpop.f32.mrb[0].mxu0
      %v484 = vadd.f32 %v387, %v483
      %v485 = vpop.f32.mrb[0].mxu0
      %486 = vmatprep.mubr.f32.mxu0 0.0
      %487 = vmatmul.mubr.f32.gmra.mrb[0].mxu0 %v405
      %v488 = vpop.f32.mrb[0].mxu0
      %v489 = vadd.f32 %v392, %v488
      %v490 = vpop.f32.mrb[0].mxu0
      %491 = vdwg.mxu0
      %v492 = vld [vmem:[%s262 + $0x2] sm:$0xff]
      %v493 = vld [vmem:[%s262 + $0xa] sm:$0xff]
      %v494 = vld [vmem:[%s262 + $0x12] sm:$0xff]
      %v495 = vld [vmem:[%s262 + $0x1a] sm:$0x3f]
      %s496 = scalar_lea.vmem %s1, 128
      %v497 = vld [vmem:[%s496] sm:$0xff]
      %v498 = vld [vmem:[%s496 + $0x8] sm:$0xff]
      %v499 = vld [vmem:[%s496 + $0x10] sm:$0xff]
      %v500 = vld [vmem:[%s496 + $0x18] sm:$0xff]
      %v501 = vld [vmem:[%s496 + $0x20] sm:$0xff]
      %v502 = vld [vmem:[%s496 + $0x28] sm:$0xff]
      %v503 = vld [vmem:[%s496 + $0x30] sm:$0xff]
      %v504 = vld [vmem:[%s496 + $0x38] sm:$0xff]
      %v506 = vsel %vm297, %v492, 0
      %v509 = vsel %vm297, %v493, 0
      %v512 = vsel %vm297, %v494, 0
      %v515 = vsel %vm297, %v495, 0
      %517 = vmatprep.subr.mxu0 0.0
      %518 = vmatpush1.msra.mxu0 %v497
      %519 = vmatprep.subr.mxu0 0.0
      %520 = vmatpush1.msra.mxu0 %v498
      %521 = vmatprep.subr.mxu0 0.0
      %522 = vmatpush1.msra.mxu0 %v499
      %523 = vmatprep.subr.mxu0 0.0
      %524 = vmatpush1.msra.mxu0 %v500
      %525 = vmatprep.subr.mxu0 0.0
      %526 = vmatpush1.msra.mxu0 %v501
      %527 = vmatprep.subr.mxu0 0.0
      %528 = vmatpush1.msra.mxu0 %v502
      %529 = vmatprep.subr.mxu0 0.0
      %530 = vmatpush1.msra.mxu0 %v503
      %531 = vmatprep.subr.mxu0 0.0
      %532 = vmatpush1.msra.mxu0 %v504
      %533 = vmatprep.subr.mxu0 0.0
      %534 = vmatpush1.msra.mxu0 0.0
      %535 = vmatprep.subr.mxu0 0.0
      %536 = vmatpush1.msra.mxu0 0.0
      %537 = vmatprep.subr.mxu0 0.0
      %538 = vmatpush1.msra.mxu0 0.0
      %539 = vmatprep.subr.mxu0 0.0
      %540 = vmatpush1.msra.mxu0 0.0
      %541 = vmatprep.subr.mxu0 0.0
      %542 = vmatpush1.msra.mxu0 0.0
      %543 = vmatprep.subr.mxu0 0.0
      %544 = vmatpush1.msra.mxu0 0.0
      %545 = vmatprep.subr.mxu0 0.0
      %546 = vmatpush1.msra.mxu0 0.0
      %547 = vmatprep.subr.mxu0 0.0
      %548 = vmatpush1.msra.mxu0 0.0
      %549 = vmatprep.subr.mxu0 0.0
      %550 = vmatpush1.msra.mxu0 0.0
      %551 = vmatprep.subr.mxu0 0.0
      %552 = vmatpush1.msra.mxu0 0.0
      %553 = vmatprep.subr.mxu0 0.0
      %554 = vmatpush1.msra.mxu0 0.0
      %555 = vmatprep.subr.mxu0 0.0
      %556 = vmatpush1.msra.mxu0 0.0
      %557 = vmatprep.subr.mxu0 0.0
      %558 = vmatpush1.msra.mxu0 0.0
      %559 = vmatprep.subr.mxu0 0.0
      %560 = vmatpush1.msra.mxu0 0.0
      %561 = vmatprep.subr.mxu0 0.0
      %562 = vmatpush1.msra.mxu0 0.0
      %563 = vmatprep.subr.mxu0 0.0
      %564 = vmatpush1.msra.mxu0 0.0
      %565 = vmatprep.subr.mxu0 0.0
      %566 = vmatpush1.msra.mxu0 0.0
      %567 = vmatprep.subr.mxu0 0.0
      %568 = vmatpush1.msra.mxu0 0.0
      %569 = vmatprep.subr.mxu0 0.0
      %570 = vmatpush1.msra.mxu0 0.0
      %571 = vmatprep.subr.mxu0 0.0
      %572 = vmatpush1.msra.mxu0 0.0
      %573 = vmatprep.subr.mxu0 0.0
      %574 = vmatpush1.msra.mxu0 0.0
      %575 = vmatprep.subr.mxu0 0.0
      %576 = vmatpush1.msra.mxu0 0.0
      %577 = vmatprep.subr.mxu0 0.0
      %578 = vmatpush1.msra.mxu0 0.0
      %579 = vmatprep.subr.mxu0 0.0
      %580 = vmatpush1.msra.mxu0 0.0
      %581 = vmatprep.mubr.f32.mxu0 0.0
      %582 = vmatmul.mubr.f32.gmra.mrb[0].mxu0 %v506
      %v583 = vpop.f32.mrb[0].mxu0
      %v584 = vadd.f32 0.0, %v583
      %v585 = vpop.f32.mrb[0].mxu0
      %586 = vmatprep.mubr.f32.mxu0 0.0
      %587 = vmatmul.mubr.f32.gmra.mrb[0].mxu0 %v509
      %v588 = vpop.f32.mrb[0].mxu0
      %v589 = vadd.f32 0.0, %v588
      %v590 = vpop.f32.mrb[0].mxu0
      %591 = vmatprep.mubr.f32.mxu0 0.0
      %592 = vmatmul.mubr.f32.gmra.mrb[0].mxu0 %v512
      %v593 = vpop.f32.mrb[0].mxu0
      %v594 = vadd.f32 0.0, %v593
      %v595 = vpop.f32.mrb[0].mxu0
      %596 = vmatprep.mubr.f32.mxu0 0.0
      %597 = vmatmul.mubr.f32.gmra.mrb[0].mxu0 %v515
      %v598 = vpop.f32.mrb[0].mxu0
      %v599 = vadd.f32 0.0, %v598
      %v600 = vpop.f32.mrb[0].mxu0
      %601 = vdwg.mxu0
      %v602 = vadd.f32 %v474, %v584
      %v603 = vadd.f32 %v479, %v589
      %v604 = vadd.f32 %v484, %v594
      %v605 = vadd.f32 %v489, %v599
      %p606 = scmp.eq.s32.totalorder %s21, 0
      %p607 = scmp.eq.s32.totalorder %s22, 0
      %p608 = pnand %p606, %p607
      %p609 = pneg %p608
      // Predicated region
      $region45: #{conv_bn_relu_forward.1} parent=43 // pred_check
        _
      $region46: #{conv_bn_relu_forward.1} parent=43 // pred_check_branch
        %611 = sbr.rel (%p608) target = $region48
      $region47: #{conv_bn_relu_forward.1} parent=43 // pred_region
        %612 = vst [vmem:[#allocation2] sm:$0x1] 0.0
        %613 = vst [vmem:[#allocation3] sm:$0x1] 0.0
      $region48: #{conv_bn_relu_forward.1} parent=43 // pred_fallthru
        _
      // Predicated region
      $region49: #{conv_bn_relu_forward.1} parent=43 // pred_check
        %p614 = pneg %p606
      $region50: #{conv_bn_relu_forward.1} parent=43 // pred_check_branch
        %616 = sbr.rel (%p614) target = $region52
      $region51: #{conv_bn_relu_forward.1} parent=43 // pred_region
        %v617 = vlaneseq
        %v618 = vshrl.u32 %v617, 7
        %v619 = vadd.s32 %v618, 8
        %v620 = vadd.s32 %v618, 16
        %v621 = vadd.s32 %v618, 24
        %vm622 = vcmp.lt.s32.totalorder %v618, 0
        %v623 = vsub.s32 0, %v618
        %v624 = vsel %vm622, %v623, %v618
        %v625 = vshrl.u32 %v624, 4
        %v626 = vand.u32 %v624, 15
        %v627 = vsub.s32 0, %v626
        %v628 = vsel %vm622, %v627, %v626
        %vm629 = vcmp.lt.s32.totalorder %v619, 0
        %v630 = vsub.s32 0, %v619
        %v631 = vsel %vm629, %v630, %v619
        %v632 = vshrl.u32 %v631, 4
        %v633 = vand.u32 %v631, 15
        %v634 = vsub.s32 0, %v633
        %v635 = vsel %vm629, %v634, %v633
        %vm636 = vcmp.lt.s32.totalorder %v620, 0
        %v637 = vsub.s32 0, %v620
        %v638 = vsel %vm636, %v637, %v620
        %v639 = vshrl.u32 %v638, 4
        %v640 = vand.u32 %v638, 15
        %v641 = vsub.s32 0, %v640
        %v642 = vsel %vm636, %v641, %v640
        %vm643 = vcmp.lt.s32.totalorder %v621, 0
        %v644 = vsub.s32 0, %v621
        %v645 = vsel %vm643, %v644, %v621
        %v646 = vshrl.u32 %v645, 4
        %v647 = vand.u32 %v645, 15
        %v648 = vsub.s32 0, %v647
        %v649 = vsel %vm643, %v648, %v647
        %vm650 = vcmp.ne.s32.totalorder %v628, 0
        %vm651 = vcmp.ne.s32.totalorder %v635, 0
        %vm652 = vcmp.ne.s32.totalorder %v642, 0
        %vm653 = vcmp.ne.s32.totalorder %v649, 0
        %vm654 = vcmp.lt.s32.totalorder %v628, 0
        %vm655 = vcmp.lt.s32.totalorder %v635, 0
        %vm656 = vcmp.lt.s32.totalorder %v642, 0
        %vm657 = vcmp.lt.s32.totalorder %v649, 0
        %vm658 = vmand %vm654, %vm650
        %vm659 = vmand %vm655, %vm651
        %vm660 = vmand %vm656, %vm652
        %vm661 = vmand %vm657, %vm653
        %v662 = vadd.s32 %v628, 16
        %v663 = vadd.s32 %v635, 16
        %v664 = vadd.s32 %v642, 16
        %v665 = vadd.s32 %v649, 16
        %v666 = vsel %vm658, %v662, %v628
        %v667 = vsel %vm659, %v663, %v635
        %v668 = vsel %vm660, %v664, %v642
        %v669 = vsel %vm661, %v665, %v649
        %vm670 = vcmp.lt.s32.totalorder %v666, 14
        %vm671 = vcmp.lt.s32.totalorder %v667, 14
        %vm672 = vcmp.lt.s32.totalorder %v668, 14
        %vm673 = vcmp.lt.s32.totalorder %v669, 14
        %v674 = vsel %vm670, 1, 0
        %v675 = vsel %vm671, 1, 0
        %v676 = vsel %vm672, 1, 0
        %v677 = vsel %vm673, 1, 0
        %v678 = vcvt.s32.f32 %v674
        %v679 = vcvt.s32.f32 %v675
        %v680 = vcvt.s32.f32 %v676
        %v681 = vcvt.s32.f32 %v677
        %v682 = vmul.f32 %v602, %v678
        %v683 = vmul.f32 %v603, %v679
        %v684 = vmul.f32 %v604, %v680
        %v685 = vmul.f32 %v605, %v681
        %v686 = vld [vmem:[#allocation2] sm:$0x1]
        %v687 = vadd.f32 %v682, %v683
        %v688 = vadd.f32 %v687, %v684
        %vm689 = vcmask 1045504
        %v690 = vsel %vm689, %v685, 0.0
        %v691 = vadd.f32 %v688, %v690
        %v692 = vrot.slane %v691, 4
        %v693 = vadd.f32 %v691, %v692
        %v694 = vrot.slane %v693, 2
        %v695 = vadd.f32 %v693, %v694
        %v696 = vrot.slane %v695, 1
        %v697 = vadd.f32 %v695, %v696
        %v698 = vadd.f32 %v686, %v697
        %699 = vst [vmem:[#allocation2] sm:$0x1] %v698
        %v700 = vld [vmem:[#allocation3] sm:$0x1]
        %v701 = vmul.f32 %v682, %v602
        %v702 = vmul.f32 %v683, %v603
        %v703 = vmul.f32 %v684, %v604
        %v704 = vmul.f32 %v685, %v605
        %v705 = vadd.f32 %v701, %v702
        %v706 = vadd.f32 %v705, %v703
        %v707 = vsel %vm689, %v704, 0.0
        %v708 = vadd.f32 %v706, %v707
        %v709 = vrot.slane %v708, 4
        %v710 = vadd.f32 %v708, %v709
        %v711 = vrot.slane %v710, 2
        %v712 = vadd.f32 %v710, %v711
        %v713 = vrot.slane %v712, 1
        %v714 = vadd.f32 %v712, %v713
        %v715 = vadd.f32 %v700, %v714
        %716 = vst [vmem:[#allocation3] sm:$0x1] %v715
      $region52: #{conv_bn_relu_forward.1} parent=43 // pred_fallthru
        _
      %p717 = scmp.eq.s32.totalorder %s21, 1
      %p718 = pnand %p717, %p607
      %p719 = pneg %p718
      // Predicated region
      $region53: #{conv_bn_relu_forward.1} parent=43 // pred_check
        _
      $region54: #{conv_bn_relu_forward.1} parent=43 // pred_check_branch
        %721 = sbr.rel (%p718) target = $region56
      $region55: #{conv_bn_relu_forward.1} parent=43 // pred_region
        %v722 = vld [vmem:[#allocation2] sm:$0x1]
        %v723 = vld [vmem:[%s4] sm:$0xff]
        %v724 = vld [vmem:[%s4 + $0x8] sm:$0xff]
        %v725 = vld [vmem:[%s4 + $0x10] sm:$0xff]
        %v726 = vld [vmem:[%s4 + $0x18] sm:$0xff]
        %v727 = vld [vmem:[%s4 + $0x20] sm:$0xff]
        %v728 = vld [vmem:[%s4 + $0x28] sm:$0xff]
        %v729 = vld [vmem:[%s4 + $0x30] sm:$0xff]
        %v730 = vld [vmem:[%s4 + $0x38] sm:$0xff]
        %v731 = vld [vmem:[%s4 + $0x40] sm:$0xff]
        %v732 = vld [vmem:[%s4 + $0x48] sm:$0xff]
        %v733 = vld [vmem:[%s4 + $0x50] sm:$0xff]
        %v734 = vld [vmem:[%s4 + $0x58] sm:$0xff]
        %v735 = vld [vmem:[%s4 + $0x60] sm:$0xff]
        %v736 = vld [vmem:[%s4 + $0x68] sm:$0xff]
        %v737 = vld [vmem:[%s4 + $0x70] sm:$0xff]
        %v738 = vld [vmem:[%s4 + $0x78] sm:$0xff]
        %739 = vmatprep.subr.mxu0 0.0
        %740 = vmatpush1.msra.mxu0 %v723
        %741 = vmatprep.subr.mxu0 0.0
        %742 = vmatpush1.msra.mxu0 %v724
        %743 = vmatprep.subr.mxu0 0.0
        %744 = vmatpush1.msra.mxu0 %v725
        %745 = vmatprep.subr.mxu0 0.0
        %746 = vmatpush1.msra.mxu0 %v726
        %747 = vmatprep.subr.mxu0 0.0
        %748 = vmatpush1.msra.mxu0 %v727
        %749 = vmatprep.subr.mxu0 0.0
        %750 = vmatpush1.msra.mxu0 %v728
        %751 = vmatprep.subr.mxu0 0.0
        %752 = vmatpush1.msra.mxu0 %v729
        %753 = vmatprep.subr.mxu0 0.0
        %754 = vmatpush1.msra.mxu0 %v730
        %755 = vmatprep.subr.mxu0 0.0
        %756 = vmatpush1.msra.mxu0 %v731
        %757 = vmatprep.subr.mxu0 0.0
        %758 = vmatpush1.msra.mxu0 %v732
        %759 = vmatprep.subr.mxu0 0.0
        %760 = vmatpush1.msra.mxu0 %v733
        %761 = vmatprep.subr.mxu0 0.0
        %762 = vmatpush1.msra.mxu0 %v734
        %763 = vmatprep.subr.mxu0 0.0
        %764 = vmatpush1.msra.mxu0 %v735
        %765 = vmatprep.subr.mxu0 0.0
        %766 = vmatpush1.msra.mxu0 %v736
        %767 = vmatprep.subr.mxu0 0.0
        %768 = vmatpush1.msra.mxu0 %v737
        %769 = vmatprep.subr.mxu0 0.0
        %770 = vmatpush1.msra.mxu0 %v738
        %771 = vmatprep.subr.mxu0 0.0
        %772 = vmatpush1.msra.mxu0 0.0
        %773 = vmatprep.subr.mxu0 0.0
        %774 = vmatpush1.msra.mxu0 0.0
        %775 = vmatprep.subr.mxu0 0.0
        %776 = vmatpush1.msra.mxu0 0.0
        %777 = vmatprep.subr.mxu0 0.0
        %778 = vmatpush1.msra.mxu0 0.0
        %779 = vmatprep.subr.mxu0 0.0
        %780 = vmatpush1.msra.mxu0 0.0
        %781 = vmatprep.subr.mxu0 0.0
        %782 = vmatpush1.msra.mxu0 0.0
        %783 = vmatprep.subr.mxu0 0.0
        %784 = vmatpush1.msra.mxu0 0.0
        %785 = vmatprep.subr.mxu0 0.0
        %786 = vmatpush1.msra.mxu0 0.0
        %787 = vmatprep.subr.mxu0 0.0
        %788 = vmatpush1.msra.mxu0 0.0
        %789 = vmatprep.subr.mxu0 0.0
        %790 = vmatpush1.msra.mxu0 0.0
        %791 = vmatprep.subr.mxu0 0.0
        %792 = vmatpush1.msra.mxu0 0.0
        %793 = vmatprep.subr.mxu0 0.0
        %794 = vmatpush1.msra.mxu0 0.0
        %795 = vmatprep.subr.mxu0 0.0
        %796 = vmatpush1.msra.mxu0 0.0
        %797 = vmatprep.subr.mxu0 0.0
        %798 = vmatpush1.msra.mxu0 0.0
        %799 = vmatprep.subr.mxu0 0.0
        %800 = vmatpush1.msra.mxu0 0.0
        %801 = vmatprep.subr.mxu0 0.0
        %802 = vmatpush1.msra.mxu0 0.0
        %803 = vmatprep.mubr.f32.mxu0 0.0
        %804 = vmatmul.mubr.f32.gmra.mrb[0].mxu0 %v722
        %v805 = vpop.f32.mrb[0].mxu0
        %v806 = vadd.f32 0.0, %v805
        %v807 = vpop.f32.mrb[0].mxu0
        %808 = vdwg.mxu0
        %v809 = vld [vmem:[#allocation3] sm:$0x1]
        %810 = vmatprep.subr.mxu0 0.0
        %811 = vmatpush1.msra.mxu0 %v723
        %812 = vmatprep.subr.mxu0 0.0
        %813 = vmatpush1.msra.mxu0 %v724
        %814 = vmatprep.subr.mxu0 0.0
        %815 = vmatpush1.msra.mxu0 %v725
        %816 = vmatprep.subr.mxu0 0.0
        %817 = vmatpush1.msra.mxu0 %v726
        %818 = vmatprep.subr.mxu0 0.0
        %819 = vmatpush1.msra.mxu0 %v727
        %820 = vmatprep.subr.mxu0 0.0
        %821 = vmatpush1.msra.mxu0 %v728
        %822 = vmatprep.subr.mxu0 0.0
        %823 = vmatpush1.msra.mxu0 %v729
        %824 = vmatprep.subr.mxu0 0.0
        %825 = vmatpush1.msra.mxu0 %v730
        %826 = vmatprep.subr.mxu0 0.0
        %827 = vmatpush1.msra.mxu0 %v731
        %828 = vmatprep.subr.mxu0 0.0
        %829 = vmatpush1.msra.mxu0 %v732
        %830 = vmatprep.subr.mxu0 0.0
        %831 = vmatpush1.msra.mxu0 %v733
        %832 = vmatprep.subr.mxu0 0.0
        %833 = vmatpush1.msra.mxu0 %v734
        %834 = vmatprep.subr.mxu0 0.0
        %835 = vmatpush1.msra.mxu0 %v735
        %836 = vmatprep.subr.mxu0 0.0
        %837 = vmatpush1.msra.mxu0 %v736
        %838 = vmatprep.subr.mxu0 0.0
        %839 = vmatpush1.msra.mxu0 %v737
        %840 = vmatprep.subr.mxu0 0.0
        %841 = vmatpush1.msra.mxu0 %v738
        %842 = vmatprep.subr.mxu0 0.0
        %843 = vmatpush1.msra.mxu0 0.0
        %844 = vmatprep.subr.mxu0 0.0
        %845 = vmatpush1.msra.mxu0 0.0
        %846 = vmatprep.subr.mxu0 0.0
        %847 = vmatpush1.msra.mxu0 0.0
        %848 = vmatprep.subr.mxu0 0.0
        %849 = vmatpush1.msra.mxu0 0.0
        %850 = vmatprep.subr.mxu0 0.0
        %851 = vmatpush1.msra.mxu0 0.0
        %852 = vmatprep.subr.mxu0 0.0
        %853 = vmatpush1.msra.mxu0 0.0
        %854 = vmatprep.subr.mxu0 0.0
        %855 = vmatpush1.msra.mxu0 0.0
        %856 = vmatprep.subr.mxu0 0.0
        %857 = vmatpush1.msra.mxu0 0.0
        %858 = vmatprep.subr.mxu0 0.0
        %859 = vmatpush1.msra.mxu0 0.0
        %860 = vmatprep.subr.mxu0 0.0
        %861 = vmatpush1.msra.mxu0 0.0
        %862 = vmatprep.subr.mxu0 0.0
        %863 = vmatpush1.msra.mxu0 0.0
        %864 = vmatprep.subr.mxu0 0.0
        %865 = vmatpush1.msra.mxu0 0.0
        %866 = vmatprep.subr.mxu0 0.0
        %867 = vmatpush1.msra.mxu0 0.0
        %868 = vmatprep.subr.mxu0 0.0
        %869 = vmatpush1.msra.mxu0 0.0
        %870 = vmatprep.subr.mxu0 0.0
        %871 = vmatpush1.msra.mxu0 0.0
        %872 = vmatprep.subr.mxu0 0.0
        %873 = vmatpush1.msra.mxu0 0.0
        %874 = vmatprep.mubr.f32.mxu0 0.0
        %875 = vmatmul.mubr.f32.gmra.mrb[0].mxu0 %v809
        %v876 = vpop.f32.mrb[0].mxu0
        %v877 = vadd.f32 0.0, %v876
        %v878 = vpop.f32.mrb[0].mxu0
        %879 = vdwg.mxu0
        %v880 = vmul.f32 %v806, 0.0025510204
        %v881 = vmul.f32 %v877, 0.0025510204
        %v882 = vmul.f32 %v880, %v880
        %v883 = vsub.f32 %v881, %v882
        %v884 = vld [vmem:[%s2] sm:$0x1]
        %v885 = vadd.f32 %v883, 1e-05
        %v886 = vrsqrt.pop %v885
        %v887 = vmul.f32 %v884, %v886
        %v888 = vld [vmem:[%s3] sm:$0x1]
        %v889 = vmul.f32 %v880, %v887
        %v890 = vsub.f32 %v888, %v889
        %v891 = vld [vmem:[%s5] sm:$0xff]
        %vm892 = vcmask 64512
        %v894 = vsel %vm892, %v887, 0
        %896 = vmatprep.subr.mxu0 0.0
        %897 = vmatpush1.msra.mxu0 %v891
        %898 = vmatprep.subr.mxu0 0.0
        %899 = vmatpush1.msra.mxu0 0.0
        %900 = vmatprep.subr.mxu0 0.0
        %901 = vmatpush1.msra.mxu0 0.0
        %902 = vmatprep.subr.mxu0 0.0
        %903 = vmatpush1.msra.mxu0 0.0
        %904 = vmatprep.subr.mxu0 0.0
        %905 = vmatpush1.msra.mxu0 0.0
        %906 = vmatprep.subr.mxu0 0.0
        %907 = vmatpush1.msra.mxu0 0.0
        %908 = vmatprep.subr.mxu0 0.0
        %909 = vmatpush1.msra.mxu0 0.0
        %910 = vmatprep.subr.mxu0 0.0
        %911 = vmatpush1.msra.mxu0 0.0
        %912 = vmatprep.subr.mxu0 0.0
        %913 = vmatpush1.msra.mxu0 0.0
        %914 = vmatprep.subr.mxu0 0.0
        %915 = vmatpush1.msra.mxu0 0.0
        %916 = vmatprep.subr.mxu0 0.0
        %917 = vmatpush1.msra.mxu0 0.0
        %918 = vmatprep.subr.mxu0 0.0
        %919 = vmatpush1.msra.mxu0 0.0
        %920 = vmatprep.subr.mxu0 0.0
        %921 = vmatpush1.msra.mxu0 0.0
        %922 = vmatprep.subr.mxu0 0.0
        %923 = vmatpush1.msra.mxu0 0.0
        %924 = vmatprep.subr.mxu0 0.0
        %925 = vmatpush1.msra.mxu0 0.0
        %926 = vmatprep.subr.mxu0 0.0
        %927 = vmatpush1.msra.mxu0 0.0
        %928 = vmatprep.subr.mxu0 0.0
        %929 = vmatpush1.msra.mxu0 0.0
        %930 = vmatprep.subr.mxu0 0.0
        %931 = vmatpush1.msra.mxu0 0.0
        %932 = vmatprep.subr.mxu0 0.0
        %933 = vmatpush1.msra.mxu0 0.0
        %934 = vmatprep.subr.mxu0 0.0
        %935 = vmatpush1.msra.mxu0 0.0
        %936 = vmatprep.subr.mxu0 0.0
        %937 = vmatpush1.msra.mxu0 0.0
        %938 = vmatprep.subr.mxu0 0.0
        %939 = vmatpush1.msra.mxu0 0.0
        %940 = vmatprep.subr.mxu0 0.0
        %941 = vmatpush1.msra.mxu0 0.0
        %942 = vmatprep.subr.mxu0 0.0
        %943 = vmatpush1.msra.mxu0 0.0
        %944 = vmatprep.subr.mxu0 0.0
        %945 = vmatpush1.msra.mxu0 0.0
        %946 = vmatprep.subr.mxu0 0.0
        %947 = vmatpush1.msra.mxu0 0.0
        %948 = vmatprep.subr.mxu0 0.0
        %949 = vmatpush1.msra.mxu0 0.0
        %950 = vmatprep.subr.mxu0 0.0
        %951 = vmatpush1.msra.mxu0 0.0
        %952 = vmatprep.subr.mxu0 0.0
        %953 = vmatpush1.msra.mxu0 0.0
        %954 = vmatprep.subr.mxu0 0.0
        %955 = vmatpush1.msra.mxu0 0.0
        %956 = vmatprep.subr.mxu0 0.0
        %957 = vmatpush1.msra.mxu0 0.0
        %958 = vmatprep.subr.mxu0 0.0
        %959 = vmatpush1.msra.mxu0 0.0
        %960 = vmatprep.mubr.f32.mxu0 0.0
        %961 = vmatmul.mubr.f32.gmra.mrb[0].mxu0 %v894
        %v962 = vpop.f32.mrb[0].mxu0
        %v963 = vadd.f32 0.0, %v962
        %v964 = vpop.f32.mrb[0].mxu0
        %965 = vdwg.mxu0
        %966 = vst [vmem:[#allocation4] sm:$0x1] %v963
        %v967 = vld [vmem:[%s5] sm:$0xff]
        %v969 = vsel %vm892, %v890, 0
        %971 = vmatprep.subr.mxu0 0.0
        %972 = vmatpush1.msra.mxu0 %v967
        %973 = vmatprep.subr.mxu0 0.0
        %974 = vmatpush1.msra.mxu0 0.0
        %975 = vmatprep.subr.mxu0 0.0
        %976 = vmatpush1.msra.mxu0 0.0
        %977 = vmatprep.subr.mxu0 0.0
        %978 = vmatpush1.msra.mxu0 0.0
        %979 = vmatprep.subr.mxu0 0.0
        %980 = vmatpush1.msra.mxu0 0.0
        %981 = vmatprep.subr.mxu0 0.0
        %982 = vmatpush1.msra.mxu0 0.0
        %983 = vmatprep.subr.mxu0 0.0
        %984 = vmatpush1.msra.mxu0 0.0
        %985 = vmatprep.subr.mxu0 0.0
        %986 = vmatpush1.msra.mxu0 0.0
        %987 = vmatprep.subr.mxu0 0.0
        %988 = vmatpush1.msra.mxu0 0.0
        %989 = vmatprep.subr.mxu0 0.0
        %990 = vmatpush1.msra.mxu0 0.0
        %991 = vmatprep.subr.mxu0 0.0
        %992 = vmatpush1.msra.mxu0 0.0
        %993 = vmatprep.subr.mxu0 0.0
        %994 = vmatpush1.msra.mxu0 0.0
        %995 = vmatprep.subr.mxu0 0.0
        %996 = vmatpush1.msra.mxu0 0.0
        %997 = vmatprep.subr.mxu0 0.0
        %998 = vmatpush1.msra.mxu0 0.0
        %999 = vmatprep.subr.mxu0 0.0
        %1000 = vmatpush1.msra.mxu0 0.0
        %1001 = vmatprep.subr.mxu0 0.0
        %1002 = vmatpush1.msra.mxu0 0.0
        %1003 = vmatprep.subr.mxu0 0.0
        %1004 = vmatpush1.msra.mxu0 0.0
        %1005 = vmatprep.subr.mxu0 0.0
        %1006 = vmatpush1.msra.mxu0 0.0
        %1007 = vmatprep.subr.mxu0 0.0
        %1008 = vmatpush1.msra.mxu0 0.0
        %1009 = vmatprep.subr.mxu0 0.0
        %1010 = vmatpush1.msra.mxu0 0.0
        %1011 = vmatprep.subr.mxu0 0.0
        %1012 = vmatpush1.msra.mxu0 0.0
        %1013 = vmatprep.subr.mxu0 0.0
        %1014 = vmatpush1.msra.mxu0 0.0
        %1015 = vmatprep.subr.mxu0 0.0
        %1016 = vmatpush1.msra.mxu0 0.0
        %1017 = vmatprep.subr.mxu0 0.0
        %1018 = vmatpush1.msra.mxu0 0.0
        %1019 = vmatprep.subr.mxu0 0.0
        %1020 = vmatpush1.msra.mxu0 0.0
        %1021 = vmatprep.subr.mxu0 0.0
        %1022 = vmatpush1.msra.mxu0 0.0
        %1023 = vmatprep.subr.mxu0 0.0
        %1024 = vmatpush1.msra.mxu0 0.0
        %1025 = vmatprep.subr.mxu0 0.0
        %1026 = vmatpush1.msra.mxu0 0.0
        %1027 = vmatprep.subr.mxu0 0.0
        %1028 = vmatpush1.msra.mxu0 0.0
        %1029 = vmatprep.subr.mxu0 0.0
        %1030 = vmatpush1.msra.mxu0 0.0
        %1031 = vmatprep.subr.mxu0 0.0
        %1032 = vmatpush1.msra.mxu0 0.0
        %1033 = vmatprep.subr.mxu0 0.0
        %1034 = vmatpush1.msra.mxu0 0.0
        %1035 = vmatprep.mubr.f32.mxu0 0.0
        %1036 = vmatmul.mubr.f32.gmra.mrb[0].mxu0 %v969
        %v1037 = vpop.f32.mrb[0].mxu0
        %v1038 = vadd.f32 0.0, %v1037
        %v1039 = vpop.f32.mrb[0].mxu0
        %1040 = vdwg.mxu0
        %1041 = vst [vmem:[#allocation5] sm:$0x1] %v1038
      $region56: #{conv_bn_relu_forward.1} parent=43 // pred_fallthru
        _
      // Predicated region
      $region57: #{conv_bn_relu_forward.1} parent=43 // pred_check
        %p1042 = pneg %p717
      $region58: #{conv_bn_relu_forward.1} parent=43 // pred_check_branch
        %1044 = sbr.rel (%p1042) target = $region60
      $region59: #{conv_bn_relu_forward.1} parent=43 // pred_region
        %v1045 = vld [vmem:[#allocation4] sm:$0x1]
        %v1047 = vlaneseq
        %v1048 = vshrl.u32 %v1047, 7
        %v1049 = vsub.s32 0, %v1048
        %v1050 = vrot.slane %v1045, %v1049
        %v1052 = vmul.f32 %v602, %v1050
        %v1053 = vmul.f32 %v603, %v1050
        %v1054 = vmul.f32 %v604, %v1050
        %v1055 = vmul.f32 %v605, %v1050
        %v1056 = vld [vmem:[#allocation5] sm:$0x1]
        %v1058 = vlaneseq
        %v1059 = vshrl.u32 %v1058, 7
        %v1060 = vsub.s32 0, %v1059
        %v1061 = vrot.slane %v1056, %v1060
        %v1063 = vadd.f32 %v1052, %v1061
        %v1064 = vadd.f32 %v1053, %v1061
        %v1065 = vadd.f32 %v1054, %v1061
        %v1066 = vadd.f32 %v1055, %v1061
        %v1067 = vmax.f32 %v1063, 0.0
        %v1068 = vmax.f32 %v1064, 0.0
        %v1069 = vmax.f32 %v1065, 0.0
        %v1070 = vmax.f32 %v1066, 0.0
        %1071 = vst [vmem:[%s269] sm:$0xff] %v1067
        %1072 = vst [vmem:[%s269 + $0x8] sm:$0xff] %v1068
        %1073 = vst [vmem:[%s269 + $0x10] sm:$0xff] %v1069
        %1074 = vst [vmem:[%s269 + $0x18] sm:$0x3f] %v1070
        %1075 = vst [vmem:[%s269 + $0x1e] sm:$0x3] 0.0
      $region60: #{conv_bn_relu_forward.1} parent=43 // pred_fallthru
        _
      %s1076 = smul.u32 %s22, %s21
      %s1077 = smul.u32 4, %s1076
      %p1078 = scmp.lt.s32.totalorder %s1077, 3
      %s1079 = scalar_select %p1078, %s1077, 3
      %s1080 = smul.addr %s1079, 8
      %s1081 = scalar_lea.vmem %s6, %s1080
      // Predicated region
      $region61: #{conv_bn_relu_forward.1} parent=43 // pred_check
        %p1082 = pneg %p180
      $region62: #{conv_bn_relu_forward.1} parent=43 // pred_check_branch
        %1084 = sbr.rel (%p1082) target = $region64
      $region63: #{conv_bn_relu_forward.1} parent=43 // pred_region
        %s1085 = smul.u32 %s22, %s21
        %s1086 = smul.u32 4, %s1085
      $region64: #{conv_bn_relu_forward.1} parent=43 // pred_fallthru
        _
    $region44: #{conv_bn_relu_forward.1} parent=5 // pred_fallthru
      _
    %p1087 = scmp.le.s32.totalorder 2, %s12
    // Predicated region
    $region65: #{conv_bn_relu_forward.1} parent=5 // pred_check
      %p1088 = pneg %p1087
    $region66: #{conv_bn_relu_forward.1} parent=5 // pred_check_branch
      %1090 = sbr.rel (%p1088) target = $region68
    $region67: #{conv_bn_relu_forward.1} parent=5 // pred_region
      %s1091 = ssub.s32 %s12, 2
      // Predicated region
      $region69: #{conv_bn_relu_forward.1} parent=67 // pred_check
        %p1092 = pneg %p186
      $region70: #{conv_bn_relu_forward.1} parent=67 // pred_check_branch
        %1094 = sbr.rel (%p1092) target = $region72
      $region71: #{conv_bn_relu_forward.1} parent=67 // pred_region
        %s1095 = smul.u32 %s24, %s23
        %s1096 = smul.u32 4, %s1095
        %p1097 = scmp.lt.s32.totalorder %s1096, 3
        %s1098 = scalar_select %p1097, %s1096, 3
        %s1099 = smul.addr %s1098, 8
        %s1100 = scalar_lea.vmem %s6, %s1099
      $region72: #{conv_bn_relu_forward.1} parent=67 // pred_fallthru
        _
    $region68: #{conv_bn_relu_forward.1} parent=5 // pred_fallthru
      _
  $region6: #{conv_bn_relu_forward.1} parent=0 // loop_footer
    %s16 = sadd.s32 1, %s12
  $region7: #{conv_bn_relu_forward.1} parent=0 // loop_footer_branch
    %11 = sbr.rel target = $region3
  $region8: #{conv_bn_relu_forward.1} parent=0 // loop_exit
    _

</llo_original>
